<compile_context>
chip_gen: v6e
topology: v6e:2x2x1
jax: 0.10.0
libtpu: 0.0.40
codegen_flags: <defaults>
</compile_context>

<pallas_src>
import functools

import jax
import jax.numpy as jnp
from jax.experimental import pallas as pl
from jax.experimental.pallas import tpu as pltpu


_LANE = 128   # lane width: pad feature axes to multiples of 128
_TM = 256     # row tile of A (output rows per grid step)
_TK = 256     # column-of-A (contraction) tile


def _round_up(x, m):
    return (x + m - 1) // m * m


def _pad2(a, rows, cols, dtype):
    out = jnp.zeros((rows, cols), dtype)
    return out.at[: a.shape[0], : a.shape[1]].set(a.astype(dtype))


# ---------------------------------------------------------------------------
# Kernels
# ---------------------------------------------------------------------------
def gcn_layer1_kernel(a_ref, xw1_ref, b1_ref, w2_ref, hw_ref, acc_ref):
    # acc = sum_k A[i, k] @ xw1[k]   (A scale already folded into xw1)
    k = pl.program_id(1)

    @pl.when(k == 0)
    def _():
        acc_ref[...] = jnp.zeros_like(acc_ref)

    a = a_ref[...].astype(jnp.float32).astype(jnp.bfloat16)   # int8 dequant
    acc_ref[...] += jnp.dot(a, xw1_ref[...],
                            preferred_element_type=jnp.float32)

    @pl.when(k == pl.num_programs(1) - 1)
    def _():
        h = jnp.maximum(acc_ref[...] + b1_ref[...], 0.0)       # bias + ReLU
        # F.dropout(x, training=self.training): identity in eval mode.
        # TODO(synk): training-mode dropout (p=0.5) via pltpu.prng_seed /
        # pltpu.prng_random_bits is omitted here (eval semantics).
        hw_ref[...] = jnp.dot(h.astype(jnp.bfloat16), w2_ref[...],
                              preferred_element_type=jnp.float32
                              ).astype(hw_ref.dtype)


def gcn_layer2_kernel(a_ref, hw_ref, b2_ref, o_ref, acc_ref):
    # acc = sum_k A[i, k] @ hw[k]; finalize: + b2 (pad mask baked in) and
    # log_softmax over the feature axis.
    k = pl.program_id(1)

    @pl.when(k == 0)
    def _():
        acc_ref[...] = jnp.zeros_like(acc_ref)

    a = a_ref[...].astype(jnp.float32).astype(jnp.bfloat16)   # int8 dequant
    acc_ref[...] += jnp.dot(a, hw_ref[...],
                            preferred_element_type=jnp.float32)

    @pl.when(k == pl.num_programs(1) - 1)
    def _():
        z = acc_ref[...] + b2_ref[...]        # padded cols get -1e30 from b2
        m = jnp.max(z, axis=1, keepdims=True)
        zs = z - m
        lse = jnp.log(jnp.sum(jnp.exp(zs), axis=1, keepdims=True))
        o_ref[...] = (zs - lse).astype(o_ref.dtype)


# ---------------------------------------------------------------------------
# Graph preprocessing (once per graph, reused across forwards)
# ---------------------------------------------------------------------------
def build_normalized_adjacency(edge_index, num_nodes):
    """D^{-1/2}(A+I)D^{-1/2} (duplicate edges count with multiplicity, matching
    PyG message-passing with unit edge weights)."""
    src = edge_index[0]
    dst = edge_index[1]
    adj = jnp.zeros((num_nodes, num_nodes), jnp.float32).at[dst, src].add(1.0)
    adj = adj + jnp.eye(num_nodes, dtype=jnp.float32)        # self loops
    deg = jnp.sum(adj, axis=1)
    dinv = jnp.where(deg > 0, jax.lax.rsqrt(deg), 0.0)
    return dinv[:, None] * adj * dinv[None, :]


def quantize_adjacency_int8(a_hat):
    """Per-tensor symmetric int8 quantization of A_hat (scale folded into the
    right-hand operands inside the forward)."""
    scale = jnp.maximum(jnp.max(jnp.abs(a_hat)), 1e-30) / 127.0
    a_q = jnp.clip(jnp.round(a_hat / scale), -127.0, 127.0).astype(jnp.int8)
    return a_q, scale


def _vmem_limit(step_bytes):
    # step_bytes already includes the default x2 double-buffering of every
    # BlockSpec plus the scratch accumulator; add margin for Mosaic internal
    # scratch and cap well below v7x's 64 MiB physical VMEM.
    need = step_bytes + (4 << 20)
    return int(min(max(need, 16 << 20), 48 << 20))


# ---------------------------------------------------------------------------
# Forward
# ---------------------------------------------------------------------------
def gcn_forward(a_q, a_scale, x, w1, b1, w2, b2):
    """a_q: [N, N] int8 quantized A_hat; a_scale: scalar; x: [N, F_in]."""
    n, _ = x.shape
    h_dim = w1.shape[1]
    o_dim = w2.shape[1]

    n_pad = _round_up(max(n, _TM), _TM)          # _TM == _TK -> divisible by both
    h_pad = _round_up(h_dim, _LANE)
    o_pad = _round_up(o_dim, _LANE)

    # Tiny XLA preprocessing (O(N*F*H)): fold the int8 scale into xw1 and W2.
    xw1 = (x.astype(jnp.float32) @ w1.astype(jnp.float32)) * a_scale
    w2_s = w2.astype(jnp.float32) * a_scale

    a_p = _pad2(a_q, n_pad, n_pad, jnp.int8)
    xw1_p = _pad2(xw1, n_pad, h_pad, jnp.bfloat16)
    w2_p = _pad2(w2_s, h_pad, o_pad, jnp.bfloat16)
    b1_p = _pad2(b1.reshape(1, -1), 1, h_pad, jnp.float32)
    # Bake the log_softmax pad mask into b2: padded columns of A@hw are exactly
    # zero (W2 padding is zero), so -1e30 here reproduces the mask for free.
    b2_p = jnp.full((1, o_pad), -1e30, jnp.float32)
    b2_p = b2_p.at[0, :o_dim].set(b2.astype(jnp.float32))

    grid = (n_pad // _TM, n_pad // _TK)          # (rows parallel, K arbitrary)
    a_map = lambda i, k: (i, k)
    k_map = lambda i, k: (k, 0)
    res_map = lambda i, k: (0, 0)
    out_map = lambda i, k: (i, 0)

    # ---- kernel 1: hw = relu(A @ xw1 + b1) @ W2 ----------------------------
    k1_step_bytes = (2 * (_TM * _TK                    # A tile (int8)
                          + _TK * h_pad * 2            # xw1 tile (bf16)
                          + h_pad * 4                  # b1
                          + h_pad * o_pad * 2          # W2
                          + _TM * o_pad * 2)           # hw output tile
                     + _TM * h_pad * 4)                # f32 accumulator
    cost1 = pl.CostEstimate(
        flops=2 * n_pad * n_pad * h_pad + 2 * n_pad * h_pad * o_pad,
        transcendentals=0,
        bytes_accessed=(n_pad * n_pad
                        + (n_pad // _TM) * n_pad * h_pad * 2
                        + h_pad * 4 + h_pad * o_pad * 2
                        + n_pad * o_pad * 2),
    )
    hw = pl.pallas_call(
        gcn_layer1_kernel,
        out_shape=jax.ShapeDtypeStruct((n_pad, o_pad), jnp.bfloat16),
        grid=grid,
        in_specs=[
            pl.BlockSpec((_TM, _TK), a_map),      # A tile (int8, streamed)
            pl.BlockSpec((_TK, h_pad), k_map),    # xw1 tile (streamed over k)
            pl.BlockSpec((1, h_pad), res_map),    # b1 (resident, tiny)
            pl.BlockSpec((h_pad, o_pad), res_map),# W2 (resident, tiny)
        ],
        out_specs=pl.BlockSpec((_TM, o_pad), out_map),
        scratch_shapes=[pltpu.VMEM((_TM, h_pad), jnp.float32)],
        compiler_params=pltpu.CompilerParams(
            dimension_semantics=("parallel", "arbitrary"),
            vmem_limit_bytes=_vmem_limit(k1_step_bytes),
        ),
        cost_estimate=cost1,
    )(a_p, xw1_p, b1_p, w2_p)

    # ---- kernel 2: log_softmax(A @ hw + b2) --------------------------------
    k2_step_bytes = (2 * (_TM * _TK                    # A tile (int8)
                          + _TK * o_pad * 2            # hw tile (bf16)
                          + o_pad * 4                  # b2
                          + _TM * o_pad * 4)           # output tile (f32)
                     + _TM * o_pad * 4)                # f32 accumulator
    cost2 = pl.CostEstimate(
        flops=2 * n_pad * n_pad * o_pad + 5 * n_pad * o_pad,
        transcendentals=n_pad * o_pad + n_pad,
        bytes_accessed=(n_pad * n_pad
                        + (n_pad // _TM) * n_pad * o_pad * 2
                        + o_pad * 4 + n_pad * o_pad * 4),
    )
    out_p = pl.pallas_call(
        gcn_layer2_kernel,
        out_shape=jax.ShapeDtypeStruct((n_pad, o_pad), jnp.float32),
        grid=grid,
        in_specs=[
            pl.BlockSpec((_TM, _TK), a_map),      # A tile (int8, streamed)
            pl.BlockSpec((_TK, o_pad), k_map),    # hw tile (streamed over k)
            pl.BlockSpec((1, o_pad), res_map),    # b2 (resident, tiny)
        ],
        out_specs=pl.BlockSpec((_TM, o_pad), out_map),
        scratch_shapes=[pltpu.VMEM((_TM, o_pad), jnp.float32)],
        compiler_params=pltpu.CompilerParams(
            dimension_semantics=("parallel", "arbitrary"),
            vmem_limit_bytes=_vmem_limit(k2_step_bytes),
        ),
        cost_estimate=cost2,
    )(a_p, hw, b2_p)

    return out_p[:n, :o_dim]


def glorot(key, shape):
    fan_in, fan_out = shape
    limit = jnp.sqrt(6.0 / (fan_in + fan_out))
    return jax.random.uniform(key, shape, jnp.float32, -limit, limit)


if __name__ == "__main__":
    key = jax.random.PRNGKey(0)
    k_x, k_e, k_w1, k_w2 = jax.random.split(key, 4)

    num_nodes = 16
    input_dim, hidden_dim, output_dim = 8, 32, 4
    num_edges = 40

    x = jax.random.normal(k_x, (num_nodes, input_dim), jnp.float32)
    edge_index = jax.random.randint(k_e, (2, num_edges), 0, num_nodes, jnp.int32)

    # GCNConv params: glorot weights, zero bias (deterministic, in-script).
    w1 = glorot(k_w1, (input_dim, hidden_dim))
    b1 = jnp.zeros((hidden_dim,), jnp.float32)
    w2 = glorot(k_w2, (hidden_dim, output_dim))
    b2 = jnp.zeros((output_dim,), jnp.float32)

    # A_hat depends only on the (static) graph: built + int8-quantized once.
    a_hat = build_normalized_adjacency(edge_index, num_nodes)
    a_q, a_scale = quantize_adjacency_int8(a_hat)

    out = jax.jit(gcn_forward)(a_q, a_scale, x, w1, b1, w2, b2)
    jax.block_until_ready(out)

    assert out.shape == (num_nodes, output_dim)
    # rows of log_softmax must exp-sum to ~1
    assert bool(jnp.all(jnp.abs(jnp.sum(jnp.exp(out), axis=1) - 1.0) < 1e-4))

    # pure-JAX f32 reference (kernel uses int8 A / bf16 MXU -> loose tolerance)
    h_ref = jnp.maximum(a_hat @ (x @ w1) + b1, 0.0)
    z_ref = a_hat @ (h_ref @ w2) + b2
    ref = jax.nn.log_softmax(z_ref, axis=1)
    assert bool(jnp.all(jnp.abs(out - ref) < 0.2))

    print("KERNEL_OK")
</pallas_src>

<mosaic_0001>
module attributes {stable_mosaic.version = 11 : i64} {
  func.func @gcn_layer1_kernel(%arg0: i32, %arg1: i32, %arg2: memref<256x256xi8, #tpu.memory_space<vmem>>, %arg3: memref<256x128xbf16, #tpu.memory_space<vmem>>, %arg4: memref<1x128xf32, #tpu.memory_space<vmem>>, %arg5: memref<128x128xbf16, #tpu.memory_space<vmem>>, %arg6: memref<256x128xbf16, #tpu.memory_space<vmem>>, %arg7: memref<256x128xf32, #tpu.memory_space<vmem>>) attributes {dimension_semantics = [#tpu.dimension_semantics<parallel>, #tpu.dimension_semantics<arbitrary>], iteration_bounds = array<i64: 1, 1>, scalar_prefetch = 0 : i64, scratch_operands = 1 : i64, tpu.core_type = #tpu.core_type<tc>, window_params = [{transform_indices = @transform_0, window_bounds = array<i64: 256, 256>}, {transform_indices = @transform_1, window_bounds = array<i64: 256, 128>}, {pipeline_mode = #tpu.pipeline_mode<synchronous>, transform_indices = @transform_2, window_bounds = array<i64: 1, 128>}, {pipeline_mode = #tpu.pipeline_mode<synchronous>, transform_indices = @transform_3, window_bounds = array<i64: 128, 128>}, {transform_indices = @transform_4, window_bounds = array<i64: 256, 128>}]} {
    %c0_i32 = arith.constant 0 : i32
    %0 = arith.cmpi eq, %arg1, %c0_i32 : i32
    %1 = arith.extui %0 : i1 to i32
    %c0_i32_0 = arith.constant 0 : i32
    %2 = arith.cmpi ne, %1, %c0_i32_0 : i32
    scf.if %2 {
      %cst_10 = arith.constant 0.000000e+00 : f32
      %14 = vector.broadcast %cst_10 : f32 to vector<256x128xf32>
      %c0_11 = arith.constant 0 : index
      %c0_12 = arith.constant 0 : index
      %15 = vector.load %arg7[%c0_11, %c0_12] : memref<256x128xf32, #tpu.memory_space<vmem>>, vector<256x128xf32>
      tpu.vector_store %arg7[%c0_11, %c0_12], %14 {strides = array<i32>} : memref<256x128xf32, #tpu.memory_space<vmem>>, vector<256x128xf32>,
    } else {
    }
    %c0 = arith.constant 0 : index
    %c0_1 = arith.constant 0 : index
    %3 = vector.load %arg2[%c0, %c0_1] : memref<256x256xi8, #tpu.memory_space<vmem>>, vector<256x256xi8>
    %4 = arith.sitofp %3 : vector<256x256xi8> to vector<256x256xf32>
    %5 = arith.truncf %4 : vector<256x256xf32> to vector<256x256xbf16>
    %c0_2 = arith.constant 0 : index
    %c0_3 = arith.constant 0 : index
    %6 = vector.load %arg7[%c0_2, %c0_3] : memref<256x128xf32, #tpu.memory_space<vmem>>, vector<256x128xf32>
    %c0_4 = arith.constant 0 : index
    %c0_5 = arith.constant 0 : index
    %7 = vector.load %arg3[%c0_4, %c0_5] : memref<256x128xbf16, #tpu.memory_space<vmem>>, vector<256x128xbf16>
    %cst = arith.constant dense<0.000000e+00> : vector<256x128xf32>
    %8 = tpu.matmul %5, %7, %cst {dimension_numbers = #tpu.dot_dimension_numbers<[1], [0], [0], [1], [0, 0, 1, 1], [], []>} : vector<256x256xbf16>, vector<256x128xbf16>, vector<256x128xf32> -> vector<256x128xf32>
    %9 = arith.addf %6, %8 : vector<256x128xf32>
    %c0_6 = arith.constant 0 : index
    %c0_7 = arith.constant 0 : index
    %10 = vector.load %arg7[%c0_6, %c0_7] : memref<256x128xf32, #tpu.memory_space<vmem>>, vector<256x128xf32>
    tpu.vector_store %arg7[%c0_6, %c0_7], %9 {strides = array<i32>} : memref<256x128xf32, #tpu.memory_space<vmem>>, vector<256x128xf32>,
    %c0_i32_8 = arith.constant 0 : i32
    %11 = arith.cmpi eq, %arg1, %c0_i32_8 : i32
    %12 = arith.extui %11 : i1 to i32
    %c0_i32_9 = arith.constant 0 : i32
    %13 = arith.cmpi ne, %12, %c0_i32_9 : i32
    scf.if %13 {
      %c0_10 = arith.constant 0 : index
      %c0_11 = arith.constant 0 : index
      %14 = vector.load %arg7[%c0_10, %c0_11] : memref<256x128xf32, #tpu.memory_space<vmem>>, vector<256x128xf32>
      %c0_12 = arith.constant 0 : index
      %c0_13 = arith.constant 0 : index
      %15 = vector.load %arg4[%c0_12, %c0_13] : memref<1x128xf32, #tpu.memory_space<vmem>>, vector<1x128xf32>
      %16 = vector.broadcast %15 : vector<1x128xf32> to vector<256x128xf32>
      %17 = arith.addf %14, %16 : vector<256x128xf32>
      %cst_14 = arith.constant 0.000000e+00 : f32
      %18 = vector.broadcast %cst_14 : f32 to vector<256x128xf32>
      %19 = arith.maximumf %17, %18 : vector<256x128xf32>
      %20 = arith.truncf %19 : vector<256x128xf32> to vector<256x128xbf16>
      %c0_15 = arith.constant 0 : index
      %c0_16 = arith.constant 0 : index
      %21 = vector.load %arg5[%c0_15, %c0_16] : memref<128x128xbf16, #tpu.memory_space<vmem>>, vector<128x128xbf16>
      %cst_17 = arith.constant dense<0.000000e+00> : vector<256x128xf32>
      %22 = tpu.matmul %20, %21, %cst_17 {dimension_numbers = #tpu.dot_dimension_numbers<[1], [0], [0], [1], [0, 0, 1, 1], [], []>} : vector<256x128xbf16>, vector<128x128xbf16>, vector<256x128xf32> -> vector<256x128xf32>
      %23 = arith.truncf %22 : vector<256x128xf32> to vector<256x128xbf16>
      %c0_18 = arith.constant 0 : index
      %c0_19 = arith.constant 0 : index
      %24 = vector.load %arg6[%c0_18, %c0_19] : memref<256x128xbf16, #tpu.memory_space<vmem>>, vector<256x128xbf16>
      tpu.vector_store %arg6[%c0_18, %c0_19], %23 {strides = array<i32>} : memref<256x128xbf16, #tpu.memory_space<vmem>>, vector<256x128xbf16>,
    } else {
    }
    return
  }
  func.func @transform_0(%arg0: i32, %arg1: i32) -> (i32, i32) {
    %c0_i32 = arith.constant 0 : i32
    return %arg0, %arg1 : i32, i32
  }
  func.func @transform_1(%arg0: i32, %arg1: i32) -> (i32, i32) {
    %c0_i32 = arith.constant 0 : i32
    %c0_i32_0 = arith.constant 0 : i32
    return %arg1, %c0_i32 : i32, i32
  }
  func.func @transform_2(%arg0: i32, %arg1: i32) -> (i32, i32) {
    %c0_i32 = arith.constant 0 : i32
    %c0_i32_0 = arith.constant 0 : i32
    %c0_i32_1 = arith.constant 0 : i32
    return %c0_i32, %c0_i32_0 : i32, i32
  }
  func.func @transform_3(%arg0: i32, %arg1: i32) -> (i32, i32) {
    %c0_i32 = arith.constant 0 : i32
    %c0_i32_0 = arith.constant 0 : i32
    %c0_i32_1 = arith.constant 0 : i32
    return %c0_i32, %c0_i32_0 : i32, i32
  }
  func.func @transform_4(%arg0: i32, %arg1: i32) -> (i32, i32) {
    %c0_i32 = arith.constant 0 : i32
    %c0_i32_0 = arith.constant 0 : i32
    return %arg0, %c0_i32 : i32, i32
  }
}

module attributes {stable_mosaic.version = 11 : i64} {
  func.func @gcn_layer2_kernel(%arg0: i32, %arg1: i32, %arg2: memref<256x256xi8, #tpu.memory_space<vmem>>, %arg3: memref<256x128xbf16, #tpu.memory_space<vmem>>, %arg4: memref<1x128xf32, #tpu.memory_space<vmem>>, %arg5: memref<256x128xf32, #tpu.memory_space<vmem>>, %arg6: memref<256x128xf32, #tpu.memory_space<vmem>>) attributes {dimension_semantics = [#tpu.dimension_semantics<parallel>, #tpu.dimension_semantics<arbitrary>], iteration_bounds = array<i64: 1, 1>, scalar_prefetch = 0 : i64, scratch_operands = 1 : i64, tpu.core_type = #tpu.core_type<tc>, window_params = [{transform_indices = @transform_0, window_bounds = array<i64: 256, 256>}, {transform_indices = @transform_1, window_bounds = array<i64: 256, 128>}, {pipeline_mode = #tpu.pipeline_mode<synchronous>, transform_indices = @transform_2, window_bounds = array<i64: 1, 128>}, {transform_indices = @transform_3, window_bounds = array<i64: 256, 128>}]} {
    %c0_i32 = arith.constant 0 : i32
    %0 = arith.cmpi eq, %arg1, %c0_i32 : i32
    %1 = arith.extui %0 : i1 to i32
    %c0_i32_0 = arith.constant 0 : i32
    %2 = arith.cmpi ne, %1, %c0_i32_0 : i32
    scf.if %2 {
      %cst_10 = arith.constant 0.000000e+00 : f32
      %14 = vector.broadcast %cst_10 : f32 to vector<256x128xf32>
      %c0_11 = arith.constant 0 : index
      %c0_12 = arith.constant 0 : index
      %15 = vector.load %arg6[%c0_11, %c0_12] : memref<256x128xf32, #tpu.memory_space<vmem>>, vector<256x128xf32>
      tpu.vector_store %arg6[%c0_11, %c0_12], %14 {strides = array<i32>} : memref<256x128xf32, #tpu.memory_space<vmem>>, vector<256x128xf32>,
    } else {
    }
    %c0 = arith.constant 0 : index
    %c0_1 = arith.constant 0 : index
    %3 = vector.load %arg2[%c0, %c0_1] : memref<256x256xi8, #tpu.memory_space<vmem>>, vector<256x256xi8>
    %4 = arith.sitofp %3 : vector<256x256xi8> to vector<256x256xf32>
    %5 = arith.truncf %4 : vector<256x256xf32> to vector<256x256xbf16>
    %c0_2 = arith.constant 0 : index
    %c0_3 = arith.constant 0 : index
    %6 = vector.load %arg6[%c0_2, %c0_3] : memref<256x128xf32, #tpu.memory_space<vmem>>, vector<256x128xf32>
    %c0_4 = arith.constant 0 : index
    %c0_5 = arith.constant 0 : index
    %7 = vector.load %arg3[%c0_4, %c0_5] : memref<256x128xbf16, #tpu.memory_space<vmem>>, vector<256x128xbf16>
    %cst = arith.constant dense<0.000000e+00> : vector<256x128xf32>
    %8 = tpu.matmul %5, %7, %cst {dimension_numbers = #tpu.dot_dimension_numbers<[1], [0], [0], [1], [0, 0, 1, 1], [], []>} : vector<256x256xbf16>, vector<256x128xbf16>, vector<256x128xf32> -> vector<256x128xf32>
    %9 = arith.addf %6, %8 : vector<256x128xf32>
    %c0_6 = arith.constant 0 : index
    %c0_7 = arith.constant 0 : index
    %10 = vector.load %arg6[%c0_6, %c0_7] : memref<256x128xf32, #tpu.memory_space<vmem>>, vector<256x128xf32>
    tpu.vector_store %arg6[%c0_6, %c0_7], %9 {strides = array<i32>} : memref<256x128xf32, #tpu.memory_space<vmem>>, vector<256x128xf32>,
    %c0_i32_8 = arith.constant 0 : i32
    %11 = arith.cmpi eq, %arg1, %c0_i32_8 : i32
    %12 = arith.extui %11 : i1 to i32
    %c0_i32_9 = arith.constant 0 : i32
    %13 = arith.cmpi ne, %12, %c0_i32_9 : i32
    scf.if %13 {
      %c0_10 = arith.constant 0 : index
      %c0_11 = arith.constant 0 : index
      %14 = vector.load %arg6[%c0_10, %c0_11] : memref<256x128xf32, #tpu.memory_space<vmem>>, vector<256x128xf32>
      %c0_12 = arith.constant 0 : index
      %c0_13 = arith.constant 0 : index
      %15 = vector.load %arg4[%c0_12, %c0_13] : memref<1x128xf32, #tpu.memory_space<vmem>>, vector<1x128xf32>
      %16 = vector.broadcast %15 : vector<1x128xf32> to vector<256x128xf32>
      %17 = arith.addf %14, %16 : vector<256x128xf32>
      %cst_14 = arith.constant dense<0xFF800000> : vector<256xf32>
      %18 = vector.multi_reduction <maximumf>, %17, %cst_14 [1] : vector<256x128xf32> to vector<256xf32>
      %19 = vector.shape_cast %18 : vector<256xf32> to vector<256x1xf32>
      %20 = vector.broadcast %19 : vector<256x1xf32> to vector<256x128xf32>
      %21 = arith.subf %17, %20 : vector<256x128xf32>
      %22 = math.exp %21 : vector<256x128xf32>
      %cst_15 = arith.constant dense<0.000000e+00> : vector<256xf32>
      %23 = vector.multi_reduction <add>, %22, %cst_15 [1] : vector<256x128xf32> to vector<256xf32>
      %24 = vector.shape_cast %23 : vector<256xf32> to vector<256x1xf32>
      %25 = math.log %24 : vector<256x1xf32>
      %26 = vector.broadcast %25 : vector<256x1xf32> to vector<256x128xf32>
      %27 = arith.subf %21, %26 : vector<256x128xf32>
      %c0_16 = arith.constant 0 : index
      %c0_17 = arith.constant 0 : index
      %28 = vector.load %arg5[%c0_16, %c0_17] : memref<256x128xf32, #tpu.memory_space<vmem>>, vector<256x128xf32>
      tpu.vector_store %arg5[%c0_16, %c0_17], %27 {strides = array<i32>} : memref<256x128xf32, #tpu.memory_space<vmem>>, vector<256x128xf32>,
    } else {
    }
    return
  }
  func.func @transform_0(%arg0: i32, %arg1: i32) -> (i32, i32) {
    %c0_i32 = arith.constant 0 : i32
    return %arg0, %arg1 : i32, i32
  }
  func.func @transform_1(%arg0: i32, %arg1: i32) -> (i32, i32) {
    %c0_i32 = arith.constant 0 : i32
    %c0_i32_0 = arith.constant 0 : i32
    return %arg1, %c0_i32 : i32, i32
  }
  func.func @transform_2(%arg0: i32, %arg1: i32) -> (i32, i32) {
    %c0_i32 = arith.constant 0 : i32
    %c0_i32_0 = arith.constant 0 : i32
    %c0_i32_1 = arith.constant 0 : i32
    return %c0_i32, %c0_i32_0 : i32, i32
  }
  func.func @transform_3(%arg0: i32, %arg1: i32) -> (i32, i32) {
    %c0_i32 = arith.constant 0 : i32
    %c0_i32_0 = arith.constant 0 : i32
    return %arg0, %c0_i32 : i32, i32
  }
}

</mosaic_0001>

<llo_original>
// kernel: gcn_forward.3
$region0: #{gcn_forward.3}
  #allocation0 [shape = 'u32[]', space=smem, size = 0x4, offset = 0x4, fixed_abs, tag = 'smem constant byte address 0x4 - core index']
  #allocation1 [shape = 'u32[144,128]{1,0:T(1,128)}', space=vmem, size = 0x12000, scoped, tag = 'internal scratch']
  #allocation2 [shape = 'f32[256,128]{1,0:T(8,128)}', space=vmem, size = 0x20000, scoped, tag = 'scratch operand']
  %s0 = inlined_call_operand.vmem [shape: s8[256,256], index: 0, kind: input, shape index: {}]
  %s1 = inlined_call_operand.vmem [shape: bf16[256,128], index: 1, kind: input, shape index: {}]
  %s2 = inlined_call_operand.vmem [shape: f32[1,128], index: 2, kind: input, shape index: {}]
  %s3 = inlined_call_operand.vmem [shape: f32[256,128], index: 3, kind: output, shape index: {}]
  %s4 = sld [smem:[#allocation0]]
  $region30: #{gcn_forward.3} parent=0
    _
  %s6 = ssub.s32 1, %s4
  %s7 = scalar_select 0, %s6, %s4
  // Predicated region
  $region2: #{gcn_forward.3} parent=0 // pred_check
    _
  $region3: #{gcn_forward.3} parent=0 // pred_check_branch
    %9 = sbr.rel (0) target = $region5
  $region4: #{gcn_forward.3} parent=0 // pred_region
    _
  $region5: #{gcn_forward.3} parent=0 // pred_fallthru
    _
  // Predicated region
  $region6: #{gcn_forward.3} parent=0 // pred_check
    _
  $region7: #{gcn_forward.3} parent=0 // pred_check_branch
    %11 = sbr.rel (0) target = $region9
  $region8: #{gcn_forward.3} parent=0 // pred_region
    _
  $region9: #{gcn_forward.3} parent=0 // pred_fallthru
    _
  // Predicated region
  $region10: #{gcn_forward.3} parent=0 // pred_check
    _
  $region11: #{gcn_forward.3} parent=0 // pred_check_branch
    %13 = sbr.rel (0) target = $region13
  $region12: #{gcn_forward.3} parent=0 // pred_region
    _
  $region13: #{gcn_forward.3} parent=0 // pred_fallthru
    _
  %p15 = scmp.eq.s32.totalorder 0, 0
  // Predicated region
  $region14: #{gcn_forward.3} parent=0 // pred_check
    %p16 = pneg %p15
  $region15: #{gcn_forward.3} parent=0 // pred_check_branch
    %18 = sbr.rel (%p16) target = $region17
  $region16: #{gcn_forward.3} parent=0 // pred_region
    %19 = vst [vmem:[#allocation2] sm:$0xff] 0.0
    %20 = vst [vmem:[#allocation2 + $0x8] sm:$0xff] 0.0
    %21 = vst [vmem:[#allocation2 + $0x10] sm:$0xff] 0.0
    %22 = vst [vmem:[#allocation2 + $0x18] sm:$0xff] 0.0
    %23 = vst [vmem:[#allocation2 + $0x20] sm:$0xff] 0.0
    %24 = vst [vmem:[#allocation2 + $0x28] sm:$0xff] 0.0
    %25 = vst [vmem:[#allocation2 + $0x30] sm:$0xff] 0.0
    %26 = vst [vmem:[#allocation2 + $0x38] sm:$0xff] 0.0
    %27 = vst [vmem:[#allocation2 + $0x40] sm:$0xff] 0.0
    %28 = vst [vmem:[#allocation2 + $0x48] sm:$0xff] 0.0
    %29 = vst [vmem:[#allocation2 + $0x50] sm:$0xff] 0.0
    %30 = vst [vmem:[#allocation2 + $0x58] sm:$0xff] 0.0
    %31 = vst [vmem:[#allocation2 + $0x60] sm:$0xff] 0.0
    %32 = vst [vmem:[#allocation2 + $0x68] sm:$0xff] 0.0
    %33 = vst [vmem:[#allocation2 + $0x70] sm:$0xff] 0.0
    %34 = vst [vmem:[#allocation2 + $0x78] sm:$0xff] 0.0
    %35 = vst [vmem:[#allocation2 + $0x80] sm:$0xff] 0.0
    %36 = vst [vmem:[#allocation2 + $0x88] sm:$0xff] 0.0
    %37 = vst [vmem:[#allocation2 + $0x90] sm:$0xff] 0.0
    %38 = vst [vmem:[#allocation2 + $0x98] sm:$0xff] 0.0
    %39 = vst [vmem:[#allocation2 + $0xa0] sm:$0xff] 0.0
    %40 = vst [vmem:[#allocation2 + $0xa8] sm:$0xff] 0.0
    %41 = vst [vmem:[#allocation2 + $0xb0] sm:$0xff] 0.0
    %42 = vst [vmem:[#allocation2 + $0xb8] sm:$0xff] 0.0
    %43 = vst [vmem:[#allocation2 + $0xc0] sm:$0xff] 0.0
    %44 = vst [vmem:[#allocation2 + $0xc8] sm:$0xff] 0.0
    %45 = vst [vmem:[#allocation2 + $0xd0] sm:$0xff] 0.0
    %46 = vst [vmem:[#allocation2 + $0xd8] sm:$0xff] 0.0
    %47 = vst [vmem:[#allocation2 + $0xe0] sm:$0xff] 0.0
    %48 = vst [vmem:[#allocation2 + $0xe8] sm:$0xff] 0.0
    %49 = vst [vmem:[#allocation2 + $0xf0] sm:$0xff] 0.0
    %50 = vst [vmem:[#allocation2 + $0xf8] sm:$0xff] 0.0
  $region17: #{gcn_forward.3} parent=0 // pred_fallthru
    _
  %v51 = vld [vmem:[%s0] sm:$0xff]
  %v52 = vld [vmem:[%s0 + $0x8] sm:$0xff]
  %v53 = vld [vmem:[%s0 + $0x10] sm:$0xff]
  %v54 = vld [vmem:[%s0 + $0x18] sm:$0xff]
  %v55 = vld [vmem:[%s0 + $0x20] sm:$0xff]
  %v56 = vld [vmem:[%s0 + $0x28] sm:$0xff]
  %v57 = vld [vmem:[%s0 + $0x30] sm:$0xff]
  %v58 = vld [vmem:[%s0 + $0x38] sm:$0xff]
  %v59 = vld [vmem:[%s0 + $0x40] sm:$0xff]
  %v60 = vld [vmem:[%s0 + $0x48] sm:$0xff]
  %v61 = vld [vmem:[%s0 + $0x50] sm:$0xff]
  %v62 = vld [vmem:[%s0 + $0x58] sm:$0xff]
  %v63 = vld [vmem:[%s0 + $0x60] sm:$0xff]
  %v64 = vld [vmem:[%s0 + $0x68] sm:$0xff]
  %v65 = vld [vmem:[%s0 + $0x70] sm:$0xff]
  %v66 = vld [vmem:[%s0 + $0x78] sm:$0xff]
  %v67 = vunpack.c.l.s8.bf16 %v51
  %v68 = vunpack.c.l.s8.bf16 %v52
  %v69 = vunpack.c.h.s8.bf16 %v51
  %v70 = vunpack.c.h.s8.bf16 %v52
  %v71 = vunpack.c.l.s8.bf16 %v53
  %v72 = vunpack.c.l.s8.bf16 %v54
  %v73 = vunpack.c.h.s8.bf16 %v53
  %v74 = vunpack.c.h.s8.bf16 %v54
  %v75 = vunpack.c.l.s8.bf16 %v55
  %v76 = vunpack.c.l.s8.bf16 %v56
  %v77 = vunpack.c.h.s8.bf16 %v55
  %v78 = vunpack.c.h.s8.bf16 %v56
  %v79 = vunpack.c.l.s8.bf16 %v57
  %v80 = vunpack.c.l.s8.bf16 %v58
  %v81 = vunpack.c.h.s8.bf16 %v57
  %v82 = vunpack.c.h.s8.bf16 %v58
  %v83 = vunpack.c.l.s8.bf16 %v59
  %v84 = vunpack.c.l.s8.bf16 %v60
  %v85 = vunpack.c.h.s8.bf16 %v59
  %v86 = vunpack.c.h.s8.bf16 %v60
  %v87 = vunpack.c.l.s8.bf16 %v61
  %v88 = vunpack.c.l.s8.bf16 %v62
  %v89 = vunpack.c.h.s8.bf16 %v61
  %v90 = vunpack.c.h.s8.bf16 %v62
  %v91 = vunpack.c.l.s8.bf16 %v63
  %v92 = vunpack.c.l.s8.bf16 %v64
  %v93 = vunpack.c.h.s8.bf16 %v63
  %v94 = vunpack.c.h.s8.bf16 %v64
  %v95 = vunpack.c.l.s8.bf16 %v65
  %v96 = vunpack.c.l.s8.bf16 %v66
  %v97 = vunpack.c.h.s8.bf16 %v65
  %v98 = vunpack.c.h.s8.bf16 %v66
  %v99 = vld [vmem:[#allocation2] sm:$0xff]
  %v100 = vld [vmem:[#allocation2 + $0x8] sm:$0xff]
  %v101 = vld [vmem:[#allocation2 + $0x10] sm:$0xff]
  %v102 = vld [vmem:[#allocation2 + $0x18] sm:$0xff]
  %v103 = vld [vmem:[#allocation2 + $0x20] sm:$0xff]
  %v104 = vld [vmem:[#allocation2 + $0x28] sm:$0xff]
  %v105 = vld [vmem:[#allocation2 + $0x30] sm:$0xff]
  %v106 = vld [vmem:[#allocation2 + $0x38] sm:$0xff]
  %v107 = vld [vmem:[#allocation2 + $0x40] sm:$0xff]
  %v108 = vld [vmem:[#allocation2 + $0x48] sm:$0xff]
  %v109 = vld [vmem:[#allocation2 + $0x50] sm:$0xff]
  %v110 = vld [vmem:[#allocation2 + $0x58] sm:$0xff]
  %v111 = vld [vmem:[#allocation2 + $0x60] sm:$0xff]
  %v112 = vld [vmem:[#allocation2 + $0x68] sm:$0xff]
  %v113 = vld [vmem:[#allocation2 + $0x70] sm:$0xff]
  %v114 = vld [vmem:[#allocation2 + $0x78] sm:$0xff]
  %v115 = vld [vmem:[#allocation2 + $0x80] sm:$0xff]
  %v116 = vld [vmem:[#allocation2 + $0x88] sm:$0xff]
  %v117 = vld [vmem:[#allocation2 + $0x90] sm:$0xff]
  %v118 = vld [vmem:[#allocation2 + $0x98] sm:$0xff]
  %v119 = vld [vmem:[#allocation2 + $0xa0] sm:$0xff]
  %v120 = vld [vmem:[#allocation2 + $0xa8] sm:$0xff]
  %v121 = vld [vmem:[#allocation2 + $0xb0] sm:$0xff]
  %v122 = vld [vmem:[#allocation2 + $0xb8] sm:$0xff]
  %v123 = vld [vmem:[#allocation2 + $0xc0] sm:$0xff]
  %v124 = vld [vmem:[#allocation2 + $0xc8] sm:$0xff]
  %v125 = vld [vmem:[#allocation2 + $0xd0] sm:$0xff]
  %v126 = vld [vmem:[#allocation2 + $0xd8] sm:$0xff]
  %v127 = vld [vmem:[#allocation2 + $0xe0] sm:$0xff]
  %v128 = vld [vmem:[#allocation2 + $0xe8] sm:$0xff]
  %v129 = vld [vmem:[#allocation2 + $0xf0] sm:$0xff]
  %v130 = vld [vmem:[#allocation2 + $0xf8] sm:$0xff]
  %v131 = vld [vmem:[%s1] sm:$0xf]
  %v132 = vld [vmem:[%s1 + $0x4] sm:$0xf]
  %v133 = vld [vmem:[%s1 + $0x8] sm:$0xf]
  %v134 = vld [vmem:[%s1 + $0xc] sm:$0xf]
  %v135 = vld [vmem:[%s1 + $0x10] sm:$0xf]
  %v136 = vld [vmem:[%s1 + $0x14] sm:$0xf]
  %v137 = vld [vmem:[%s1 + $0x18] sm:$0xf]
  %v138 = vld [vmem:[%s1 + $0x1c] sm:$0xf]
  %v139 = vld [vmem:[%s1 + $0x20] sm:$0xf]
  %v140 = vld [vmem:[%s1 + $0x24] sm:$0xf]
  %v141 = vld [vmem:[%s1 + $0x28] sm:$0xf]
  %v142 = vld [vmem:[%s1 + $0x2c] sm:$0xf]
  %v143 = vld [vmem:[%s1 + $0x30] sm:$0xf]
  %v144 = vld [vmem:[%s1 + $0x34] sm:$0xf]
  %v145 = vld [vmem:[%s1 + $0x38] sm:$0xf]
  %v146 = vld [vmem:[%s1 + $0x3c] sm:$0xf]
  %v147 = vld [vmem:[%s1 + $0x40] sm:$0xf]
  %v148 = vld [vmem:[%s1 + $0x44] sm:$0xf]
  %v149 = vld [vmem:[%s1 + $0x48] sm:$0xf]
  %v150 = vld [vmem:[%s1 + $0x4c] sm:$0xf]
  %v151 = vld [vmem:[%s1 + $0x50] sm:$0xf]
  %v152 = vld [vmem:[%s1 + $0x54] sm:$0xf]
  %v153 = vld [vmem:[%s1 + $0x58] sm:$0xf]
  %v154 = vld [vmem:[%s1 + $0x5c] sm:$0xf]
  %v155 = vld [vmem:[%s1 + $0x60] sm:$0xf]
  %v156 = vld [vmem:[%s1 + $0x64] sm:$0xf]
  %v157 = vld [vmem:[%s1 + $0x68] sm:$0xf]
  %v158 = vld [vmem:[%s1 + $0x6c] sm:$0xf]
  %v159 = vld [vmem:[%s1 + $0x70] sm:$0xf]
  %v160 = vld [vmem:[%s1 + $0x74] sm:$0xf]
  %v161 = vld [vmem:[%s1 + $0x78] sm:$0xf]
  %v162 = vld [vmem:[%s1 + $0x7c] sm:$0xf]
  %v195 = vunpack.c.l.b16 %v131
  %v196 = vunpack.c.l.b16 %v132
  %v197 = vunpack.c.l.b16 %v133
  %v198 = vunpack.c.l.b16 %v134
  %v199 = vunpack.c.l.b16 %v135
  %v200 = vunpack.c.l.b16 %v136
  %v201 = vunpack.c.l.b16 %v137
  %v202 = vunpack.c.l.b16 %v138
  %v203 = vunpack.c.l.b16 %v139
  %v204 = vunpack.c.l.b16 %v140
  %v205 = vunpack.c.l.b16 %v141
  %v206 = vunpack.c.l.b16 %v142
  %v207 = vunpack.c.l.b16 %v143
  %v208 = vunpack.c.l.b16 %v144
  %v209 = vunpack.c.l.b16 %v145
  %v210 = vunpack.c.l.b16 %v146
  %v211 = vunpack.c.l.b16 %v147
  %v212 = vunpack.c.l.b16 %v148
  %v213 = vunpack.c.l.b16 %v149
  %v214 = vunpack.c.l.b16 %v150
  %v215 = vunpack.c.l.b16 %v151
  %v216 = vunpack.c.l.b16 %v152
  %v217 = vunpack.c.l.b16 %v153
  %v218 = vunpack.c.l.b16 %v154
  %v219 = vunpack.c.l.b16 %v155
  %v220 = vunpack.c.l.b16 %v156
  %v221 = vunpack.c.l.b16 %v157
  %v222 = vunpack.c.l.b16 %v158
  %v223 = vunpack.c.l.b16 %v159
  %v224 = vunpack.c.l.b16 %v160
  %v225 = vunpack.c.l.b16 %v161
  %v226 = vunpack.c.l.b16 %v162
  %v227 = vpack.c.b16 %v196, %v195
  %v228 = vpack.c.b16 %v198, %v197
  %v229 = vpack.c.b16 %v200, %v199
  %v230 = vpack.c.b16 %v202, %v201
  %v231 = vpack.c.b16 %v204, %v203
  %v232 = vpack.c.b16 %v206, %v205
  %v233 = vpack.c.b16 %v208, %v207
  %v234 = vpack.c.b16 %v210, %v209
  %v235 = vpack.c.b16 %v212, %v211
  %v236 = vpack.c.b16 %v214, %v213
  %v237 = vpack.c.b16 %v216, %v215
  %v238 = vpack.c.b16 %v218, %v217
  %v239 = vpack.c.b16 %v220, %v219
  %v240 = vpack.c.b16 %v222, %v221
  %v241 = vpack.c.b16 %v224, %v223
  %v242 = vpack.c.b16 %v226, %v225
  %259 = vmatprep.subr.bf16.mxu0 0
  %260 = vmatpush1.bf16.msra.mxu0 %v234
  %261 = vmatprep.subr.bf16.mxu0 0
  %262 = vmatpush1.bf16.msra.mxu0 %v233
  %263 = vmatprep.subr.bf16.mxu0 0
  %264 = vmatpush1.bf16.msra.mxu0 %v232
  %265 = vmatprep.subr.bf16.mxu0 0
  %266 = vmatpush1.bf16.msra.mxu0 %v231
  %267 = vmatprep.subr.bf16.mxu0 0
  %268 = vmatpush1.bf16.msra.mxu0 %v230
  %269 = vmatprep.subr.bf16.mxu0 0
  %270 = vmatpush1.bf16.msra.mxu0 %v229
  %271 = vmatprep.subr.bf16.mxu0 0
  %272 = vmatpush1.bf16.msra.mxu0 %v228
  %273 = vmatprep.subr.bf16.mxu0 0
  %274 = vmatpush1.bf16.msra.mxu0 %v227
  %275 = vmatprep.subr.bf16.mxu0 0
  %276 = vmatpush2.bf16.msra.mxu0 %v242
  %277 = vmatprep.subr.bf16.mxu0 0
  %278 = vmatpush2.bf16.msra.mxu0 %v241
  %279 = vmatprep.subr.bf16.mxu0 0
  %280 = vmatpush2.bf16.msra.mxu0 %v240
  %281 = vmatprep.subr.bf16.mxu0 0
  %282 = vmatpush2.bf16.msra.mxu0 %v239
  %283 = vmatprep.subr.bf16.mxu0 0
  %284 = vmatpush2.bf16.msra.mxu0 %v238
  %285 = vmatprep.subr.bf16.mxu0 0
  %286 = vmatpush2.bf16.msra.mxu0 %v237
  %287 = vmatprep.subr.bf16.mxu0 0
  %288 = vmatpush2.bf16.msra.mxu0 %v236
  %289 = vmatprep.subr.bf16.mxu0 0
  %290 = vmatpush2.bf16.msra.mxu0 %v235
  %291 = vmatprep.mubr.bf16.mxu0 %v68
  %292 = vmatmul.mubr.bf16.gmra.mxu0 %v67
  %v293 = vpop.f32.mrf.mxu0
  %v294 = vadd.f32 0.0, %v293
  %v295 = vpop.f32.mrf.mxu0
  %v296 = vpop.f32.mrf.mxu0
  %v297 = vadd.f32 0.0, %v296
  %v298 = vpop.f32.mrf.mxu0
  %299 = vmatprep.mubr.bf16.mxu0 %v70
  %300 = vmatmul.mubr.bf16.gmra.mxu0 %v69
  %v301 = vpop.f32.mrf.mxu0
  %v302 = vadd.f32 0.0, %v301
  %v303 = vpop.f32.mrf.mxu0
  %v304 = vpop.f32.mrf.mxu0
  %v305 = vadd.f32 0.0, %v304
  %v306 = vpop.f32.mrf.mxu0
  %307 = vmatprep.mubr.bf16.mxu0 %v72
  %308 = vmatmul.mubr.bf16.gmra.mxu0 %v71
  %v309 = vpop.f32.mrf.mxu0
  %v310 = vadd.f32 0.0, %v309
  %v311 = vpop.f32.mrf.mxu0
  %v312 = vpop.f32.mrf.mxu0
  %v313 = vadd.f32 0.0, %v312
  %v314 = vpop.f32.mrf.mxu0
  %315 = vmatprep.mubr.bf16.mxu0 %v74
  %316 = vmatmul.mubr.bf16.gmra.mxu0 %v73
  %v317 = vpop.f32.mrf.mxu0
  %v318 = vadd.f32 0.0, %v317
  %v319 = vpop.f32.mrf.mxu0
  %v320 = vpop.f32.mrf.mxu0
  %v321 = vadd.f32 0.0, %v320
  %v322 = vpop.f32.mrf.mxu0
  %323 = vmatprep.mubr.bf16.mxu0 %v76
  %324 = vmatmul.mubr.bf16.gmra.mxu0 %v75
  %v325 = vpop.f32.mrf.mxu0
  %v326 = vadd.f32 0.0, %v325
  %v327 = vpop.f32.mrf.mxu0
  %v328 = vpop.f32.mrf.mxu0
  %v329 = vadd.f32 0.0, %v328
  %v330 = vpop.f32.mrf.mxu0
  %331 = vmatprep.mubr.bf16.mxu0 %v78
  %332 = vmatmul.mubr.bf16.gmra.mxu0 %v77
  %v333 = vpop.f32.mrf.mxu0
  %v334 = vadd.f32 0.0, %v333
  %v335 = vpop.f32.mrf.mxu0
  %v336 = vpop.f32.mrf.mxu0
  %v337 = vadd.f32 0.0, %v336
  %v338 = vpop.f32.mrf.mxu0
  %339 = vmatprep.mubr.bf16.mxu0 %v80
  %340 = vmatmul.mubr.bf16.gmra.mxu0 %v79
  %v341 = vpop.f32.mrf.mxu0
  %v342 = vadd.f32 0.0, %v341
  %v343 = vpop.f32.mrf.mxu0
  %v344 = vpop.f32.mrf.mxu0
  %v345 = vadd.f32 0.0, %v344
  %v346 = vpop.f32.mrf.mxu0
  %347 = vmatprep.mubr.bf16.mxu0 %v82
  %348 = vmatmul.mubr.bf16.gmra.mxu0 %v81
  %v349 = vpop.f32.mrf.mxu0
  %v350 = vadd.f32 0.0, %v349
  %v351 = vpop.f32.mrf.mxu0
  %v352 = vpop.f32.mrf.mxu0
  %v353 = vadd.f32 0.0, %v352
  %v354 = vpop.f32.mrf.mxu0
  %355 = vmatprep.mubr.bf16.mxu0 %v84
  %356 = vmatmul.mubr.bf16.gmra.mxu0 %v83
  %v357 = vpop.f32.mrf.mxu0
  %v358 = vadd.f32 0.0, %v357
  %v359 = vpop.f32.mrf.mxu0
  %v360 = vpop.f32.mrf.mxu0
  %v361 = vadd.f32 0.0, %v360
  %v362 = vpop.f32.mrf.mxu0
  %363 = vmatprep.mubr.bf16.mxu0 %v86
  %364 = vmatmul.mubr.bf16.gmra.mxu0 %v85
  %v365 = vpop.f32.mrf.mxu0
  %v366 = vadd.f32 0.0, %v365
  %v367 = vpop.f32.mrf.mxu0
  %v368 = vpop.f32.mrf.mxu0
  %v369 = vadd.f32 0.0, %v368
  %v370 = vpop.f32.mrf.mxu0
  %371 = vmatprep.mubr.bf16.mxu0 %v88
  %372 = vmatmul.mubr.bf16.gmra.mxu0 %v87
  %v373 = vpop.f32.mrf.mxu0
  %v374 = vadd.f32 0.0, %v373
  %v375 = vpop.f32.mrf.mxu0
  %v376 = vpop.f32.mrf.mxu0
  %v377 = vadd.f32 0.0, %v376
  %v378 = vpop.f32.mrf.mxu0
  %379 = vmatprep.mubr.bf16.mxu0 %v90
  %380 = vmatmul.mubr.bf16.gmra.mxu0 %v89
  %v381 = vpop.f32.mrf.mxu0
  %v382 = vadd.f32 0.0, %v381
  %v383 = vpop.f32.mrf.mxu0
  %v384 = vpop.f32.mrf.mxu0
  %v385 = vadd.f32 0.0, %v384
  %v386 = vpop.f32.mrf.mxu0
  %387 = vmatprep.mubr.bf16.mxu0 %v92
  %388 = vmatmul.mubr.bf16.gmra.mxu0 %v91
  %v389 = vpop.f32.mrf.mxu0
  %v390 = vadd.f32 0.0, %v389
  %v391 = vpop.f32.mrf.mxu0
  %v392 = vpop.f32.mrf.mxu0
  %v393 = vadd.f32 0.0, %v392
  %v394 = vpop.f32.mrf.mxu0
  %395 = vmatprep.mubr.bf16.mxu0 %v94
  %396 = vmatmul.mubr.bf16.gmra.mxu0 %v93
  %v397 = vpop.f32.mrf.mxu0
  %v398 = vadd.f32 0.0, %v397
  %v399 = vpop.f32.mrf.mxu0
  %v400 = vpop.f32.mrf.mxu0
  %v401 = vadd.f32 0.0, %v400
  %v402 = vpop.f32.mrf.mxu0
  %403 = vmatprep.mubr.bf16.mxu0 %v96
  %404 = vmatmul.mubr.bf16.gmra.mxu0 %v95
  %v405 = vpop.f32.mrf.mxu0
  %v406 = vadd.f32 0.0, %v405
  %v407 = vpop.f32.mrf.mxu0
  %v408 = vpop.f32.mrf.mxu0
  %v409 = vadd.f32 0.0, %v408
  %v410 = vpop.f32.mrf.mxu0
  %411 = vmatprep.mubr.bf16.mxu0 %v98
  %412 = vmatmul.mubr.bf16.gmra.mxu0 %v97
  %v413 = vpop.f32.mrf.mxu0
  %v414 = vadd.f32 0.0, %v413
  %v415 = vpop.f32.mrf.mxu0
  %v416 = vpop.f32.mrf.mxu0
  %v417 = vadd.f32 0.0, %v416
  %v418 = vpop.f32.mrf.mxu0
  %419 = vdwg.mxu0
  %v420 = vadd.f32 %v99, %v294
  %v421 = vadd.f32 %v100, %v297
  %v422 = vadd.f32 %v101, %v302
  %v423 = vadd.f32 %v102, %v305
  %v424 = vadd.f32 %v103, %v310
  %v425 = vadd.f32 %v104, %v313
  %v426 = vadd.f32 %v105, %v318
  %v427 = vadd.f32 %v106, %v321
  %v428 = vadd.f32 %v107, %v326
  %v429 = vadd.f32 %v108, %v329
  %v430 = vadd.f32 %v109, %v334
  %v431 = vadd.f32 %v110, %v337
  %v432 = vadd.f32 %v111, %v342
  %v433 = vadd.f32 %v112, %v345
  %v434 = vadd.f32 %v113, %v350
  %v435 = vadd.f32 %v114, %v353
  %v436 = vadd.f32 %v115, %v358
  %v437 = vadd.f32 %v116, %v361
  %v438 = vadd.f32 %v117, %v366
  %v439 = vadd.f32 %v118, %v369
  %v440 = vadd.f32 %v119, %v374
  %v441 = vadd.f32 %v120, %v377
  %v442 = vadd.f32 %v121, %v382
  %v443 = vadd.f32 %v122, %v385
  %v444 = vadd.f32 %v123, %v390
  %v445 = vadd.f32 %v124, %v393
  %v446 = vadd.f32 %v125, %v398
  %v447 = vadd.f32 %v126, %v401
  %v448 = vadd.f32 %v127, %v406
  %v449 = vadd.f32 %v128, %v409
  %v450 = vadd.f32 %v129, %v414
  %v451 = vadd.f32 %v130, %v417
  %452 = vst [vmem:[#allocation2] sm:$0xff] %v420
  %453 = vst [vmem:[#allocation2 + $0x8] sm:$0xff] %v421
  %454 = vst [vmem:[#allocation2 + $0x10] sm:$0xff] %v422
  %455 = vst [vmem:[#allocation2 + $0x18] sm:$0xff] %v423
  %456 = vst [vmem:[#allocation2 + $0x20] sm:$0xff] %v424
  %457 = vst [vmem:[#allocation2 + $0x28] sm:$0xff] %v425
  %458 = vst [vmem:[#allocation2 + $0x30] sm:$0xff] %v426
  %459 = vst [vmem:[#allocation2 + $0x38] sm:$0xff] %v427
  %460 = vst [vmem:[#allocation2 + $0x40] sm:$0xff] %v428
  %461 = vst [vmem:[#allocation2 + $0x48] sm:$0xff] %v429
  %462 = vst [vmem:[#allocation2 + $0x50] sm:$0xff] %v430
  %463 = vst [vmem:[#allocation2 + $0x58] sm:$0xff] %v431
  %464 = vst [vmem:[#allocation2 + $0x60] sm:$0xff] %v432
  %465 = vst [vmem:[#allocation2 + $0x68] sm:$0xff] %v433
  %466 = vst [vmem:[#allocation2 + $0x70] sm:$0xff] %v434
  %467 = vst [vmem:[#allocation2 + $0x78] sm:$0xff] %v435
  %468 = vst [vmem:[#allocation2 + $0x80] sm:$0xff] %v436
  %469 = vst [vmem:[#allocation2 + $0x88] sm:$0xff] %v437
  %470 = vst [vmem:[#allocation2 + $0x90] sm:$0xff] %v438
  %471 = vst [vmem:[#allocation2 + $0x98] sm:$0xff] %v439
  %472 = vst [vmem:[#allocation2 + $0xa0] sm:$0xff] %v440
  %473 = vst [vmem:[#allocation2 + $0xa8] sm:$0xff] %v441
  %474 = vst [vmem:[#allocation2 + $0xb0] sm:$0xff] %v442
  %475 = vst [vmem:[#allocation2 + $0xb8] sm:$0xff] %v443
  %476 = vst [vmem:[#allocation2 + $0xc0] sm:$0xff] %v444
  %477 = vst [vmem:[#allocation2 + $0xc8] sm:$0xff] %v445
  %478 = vst [vmem:[#allocation2 + $0xd0] sm:$0xff] %v446
  %479 = vst [vmem:[#allocation2 + $0xd8] sm:$0xff] %v447
  %480 = vst [vmem:[#allocation2 + $0xe0] sm:$0xff] %v448
  %481 = vst [vmem:[#allocation2 + $0xe8] sm:$0xff] %v449
  %482 = vst [vmem:[#allocation2 + $0xf0] sm:$0xff] %v450
  %483 = vst [vmem:[#allocation2 + $0xf8] sm:$0xff] %v451
  // Predicated region
  $region18: #{gcn_forward.3} parent=0 // pred_check
    %p484 = pneg %p15
  $region19: #{gcn_forward.3} parent=0 // pred_check_branch
    %486 = sbr.rel (%p484) target = $region21
  $region20: #{gcn_forward.3} parent=0 // pred_region
    %v487 = vld [vmem:[#allocation2] sm:$0xff]
    %v488 = vld [vmem:[#allocation2 + $0x8] sm:$0xff]
    %v489 = vld [vmem:[#allocation2 + $0x10] sm:$0xff]
    %v490 = vld [vmem:[#allocation2 + $0x18] sm:$0xff]
    %v491 = vld [vmem:[#allocation2 + $0x20] sm:$0xff]
    %v492 = vld [vmem:[#allocation2 + $0x28] sm:$0xff]
    %v493 = vld [vmem:[#allocation2 + $0x30] sm:$0xff]
    %v494 = vld [vmem:[#allocation2 + $0x38] sm:$0xff]
    %v495 = vld [vmem:[#allocation2 + $0x40] sm:$0xff]
    %v496 = vld [vmem:[#allocation2 + $0x48] sm:$0xff]
    %v497 = vld [vmem:[#allocation2 + $0x50] sm:$0xff]
    %v498 = vld [vmem:[#allocation2 + $0x58] sm:$0xff]
    %v499 = vld [vmem:[#allocation2 + $0x60] sm:$0xff]
    %v500 = vld [vmem:[#allocation2 + $0x68] sm:$0xff]
    %v501 = vld [vmem:[#allocation2 + $0x70] sm:$0xff]
    %v502 = vld [vmem:[#allocation2 + $0x78] sm:$0xff]
    %v503 = vld [vmem:[#allocation2 + $0x80] sm:$0xff]
    %v504 = vld [vmem:[#allocation2 + $0x88] sm:$0xff]
    %v505 = vld [vmem:[#allocation2 + $0x90] sm:$0xff]
    %v506 = vld [vmem:[#allocation2 + $0x98] sm:$0xff]
    %v507 = vld [vmem:[#allocation2 + $0xa0] sm:$0xff]
    %v508 = vld [vmem:[#allocation2 + $0xa8] sm:$0xff]
    %v509 = vld [vmem:[#allocation2 + $0xb0] sm:$0xff]
    %v510 = vld [vmem:[#allocation2 + $0xb8] sm:$0xff]
    %v511 = vld [vmem:[#allocation2 + $0xc0] sm:$0xff]
    %v512 = vld [vmem:[#allocation2 + $0xc8] sm:$0xff]
    %v513 = vld [vmem:[#allocation2 + $0xd0] sm:$0xff]
    %v514 = vld [vmem:[#allocation2 + $0xd8] sm:$0xff]
    %v515 = vld [vmem:[#allocation2 + $0xe0] sm:$0xff]
    %v516 = vld [vmem:[#allocation2 + $0xe8] sm:$0xff]
    %v517 = vld [vmem:[#allocation2 + $0xf0] sm:$0xff]
    %v518 = vld [vmem:[#allocation2 + $0xf8] sm:$0xff]
    %v519 = vld [vmem:[%s2] sm:$0x1]
    %v521 = vlaneseq
    %v522 = vshrl.u32 %v521, 7
    %v523 = vsub.s32 0, %v522
    %v524 = vrot.slane %v519, %v523
    %v526 = vadd.f32 %v487, %v524
    %v527 = vadd.f32 %v488, %v524
    %v528 = vadd.f32 %v489, %v524
    %v529 = vadd.f32 %v490, %v524
    %v530 = vadd.f32 %v491, %v524
    %v531 = vadd.f32 %v492, %v524
    %v532 = vadd.f32 %v493, %v524
    %v533 = vadd.f32 %v494, %v524
    %v534 = vadd.f32 %v495, %v524
    %v535 = vadd.f32 %v496, %v524
    %v536 = vadd.f32 %v497, %v524
    %v537 = vadd.f32 %v498, %v524
    %v538 = vadd.f32 %v499, %v524
    %v539 = vadd.f32 %v500, %v524
    %v540 = vadd.f32 %v501, %v524
    %v541 = vadd.f32 %v502, %v524
    %v542 = vadd.f32 %v503, %v524
    %v543 = vadd.f32 %v504, %v524
    %v544 = vadd.f32 %v505, %v524
    %v545 = vadd.f32 %v506, %v524
    %v546 = vadd.f32 %v507, %v524
    %v547 = vadd.f32 %v508, %v524
    %v548 = vadd.f32 %v509, %v524
    %v549 = vadd.f32 %v510, %v524
    %v550 = vadd.f32 %v511, %v524
    %v551 = vadd.f32 %v512, %v524
    %v552 = vadd.f32 %v513, %v524
    %v553 = vadd.f32 %v514, %v524
    %v554 = vadd.f32 %v515, %v524
    %v555 = vadd.f32 %v516, %v524
    %v556 = vadd.f32 %v517, %v524
    %v557 = vadd.f32 %v518, %v524
    %558 = vmax.xlane.f32.xlu0 %v526
    %v559 = vpop.xlane.xlu0 %558
    %560 = vmax.xlane.f32.xlu0 %v527
    %v561 = vpop.xlane.xlu0 %560
    %562 = vmax.xlane.f32.xlu0 %v528
    %v563 = vpop.xlane.xlu0 %562
    %564 = vmax.xlane.f32.xlu0 %v529
    %v565 = vpop.xlane.xlu0 %564
    %566 = vmax.xlane.f32.xlu0 %v530
    %v567 = vpop.xlane.xlu0 %566
    %568 = vmax.xlane.f32.xlu0 %v531
    %v569 = vpop.xlane.xlu0 %568
    %570 = vmax.xlane.f32.xlu0 %v532
    %v571 = vpop.xlane.xlu0 %570
    %572 = vmax.xlane.f32.xlu0 %v533
    %v573 = vpop.xlane.xlu0 %572
    %574 = vmax.xlane.f32.xlu0 %v534
    %v575 = vpop.xlane.xlu0 %574
    %576 = vmax.xlane.f32.xlu0 %v535
    %v577 = vpop.xlane.xlu0 %576
    %578 = vmax.xlane.f32.xlu0 %v536
    %v579 = vpop.xlane.xlu0 %578
    %580 = vmax.xlane.f32.xlu0 %v537
    %v581 = vpop.xlane.xlu0 %580
    %582 = vmax.xlane.f32.xlu0 %v538
    %v583 = vpop.xlane.xlu0 %582
    %584 = vmax.xlane.f32.xlu0 %v539
    %v585 = vpop.xlane.xlu0 %584
    %586 = vmax.xlane.f32.xlu0 %v540
    %v587 = vpop.xlane.xlu0 %586
    %588 = vmax.xlane.f32.xlu0 %v541
    %v589 = vpop.xlane.xlu0 %588
    %590 = vmax.xlane.f32.xlu0 %v542
    %v591 = vpop.xlane.xlu0 %590
    %592 = vmax.xlane.f32.xlu0 %v543
    %v593 = vpop.xlane.xlu0 %592
    %594 = vmax.xlane.f32.xlu0 %v544
    %v595 = vpop.xlane.xlu0 %594
    %596 = vmax.xlane.f32.xlu0 %v545
    %v597 = vpop.xlane.xlu0 %596
    %598 = vmax.xlane.f32.xlu0 %v546
    %v599 = vpop.xlane.xlu0 %598
    %600 = vmax.xlane.f32.xlu0 %v547
    %v601 = vpop.xlane.xlu0 %600
    %602 = vmax.xlane.f32.xlu0 %v548
    %v603 = vpop.xlane.xlu0 %602
    %604 = vmax.xlane.f32.xlu0 %v549
    %v605 = vpop.xlane.xlu0 %604
    %606 = vmax.xlane.f32.xlu0 %v550
    %v607 = vpop.xlane.xlu0 %606
    %608 = vmax.xlane.f32.xlu0 %v551
    %v609 = vpop.xlane.xlu0 %608
    %610 = vmax.xlane.f32.xlu0 %v552
    %v611 = vpop.xlane.xlu0 %610
    %612 = vmax.xlane.f32.xlu0 %v553
    %v613 = vpop.xlane.xlu0 %612
    %614 = vmax.xlane.f32.xlu0 %v554
    %v615 = vpop.xlane.xlu0 %614
    %616 = vmax.xlane.f32.xlu0 %v555
    %v617 = vpop.xlane.xlu0 %616
    %618 = vmax.xlane.f32.xlu0 %v556
    %v619 = vpop.xlane.xlu0 %618
    %620 = vmax.xlane.f32.xlu0 %v557
    %v621 = vpop.xlane.xlu0 %620
    %v622 = vsub.f32 %v526, %v559
    %v623 = vsub.f32 %v527, %v561
    %v624 = vsub.f32 %v528, %v563
    %v625 = vsub.f32 %v529, %v565
    %v626 = vsub.f32 %v530, %v567
    %v627 = vsub.f32 %v531, %v569
    %v628 = vsub.f32 %v532, %v571
    %v629 = vsub.f32 %v533, %v573
    %v630 = vsub.f32 %v534, %v575
    %v631 = vsub.f32 %v535, %v577
    %v632 = vsub.f32 %v536, %v579
    %v633 = vsub.f32 %v537, %v581
    %v634 = vsub.f32 %v538, %v583
    %v635 = vsub.f32 %v539, %v585
    %v636 = vsub.f32 %v540, %v587
    %v637 = vsub.f32 %v541, %v589
    %v638 = vsub.f32 %v542, %v591
    %v639 = vsub.f32 %v543, %v593
    %v640 = vsub.f32 %v544, %v595
    %v641 = vsub.f32 %v545, %v597
    %v642 = vsub.f32 %v546, %v599
    %v643 = vsub.f32 %v547, %v601
    %v644 = vsub.f32 %v548, %v603
    %v645 = vsub.f32 %v549, %v605
    %v646 = vsub.f32 %v550, %v607
    %v647 = vsub.f32 %v551, %v609
    %v648 = vsub.f32 %v552, %v611
    %v649 = vsub.f32 %v553, %v613
    %v650 = vsub.f32 %v554, %v615
    %v651 = vsub.f32 %v555, %v617
    %v652 = vsub.f32 %v556, %v619
    %v653 = vsub.f32 %v557, %v621
    %v654 = vmul.f32 %v622, 1.442695
    %v655 = vpow.pop %v654
    %v656 = vmul.f32 %v623, 1.442695
    %v657 = vpow.pop %v656
    %v658 = vmul.f32 %v624, 1.442695
    %v659 = vpow.pop %v658
    %v660 = vmul.f32 %v625, 1.442695
    %v661 = vpow.pop %v660
    %v662 = vmul.f32 %v626, 1.442695
    %v663 = vpow.pop %v662
    %v664 = vmul.f32 %v627, 1.442695
    %v665 = vpow.pop %v664
    %v666 = vmul.f32 %v628, 1.442695
    %v667 = vpow.pop %v666
    %v668 = vmul.f32 %v629, 1.442695
    %v669 = vpow.pop %v668
    %v670 = vmul.f32 %v630, 1.442695
    %v671 = vpow.pop %v670
    %v672 = vmul.f32 %v631, 1.442695
    %v673 = vpow.pop %v672
    %v674 = vmul.f32 %v632, 1.442695
    %v675 = vpow.pop %v674
    %v676 = vmul.f32 %v633, 1.442695
    %v677 = vpow.pop %v676
    %v678 = vmul.f32 %v634, 1.442695
    %v679 = vpow.pop %v678
    %v680 = vmul.f32 %v635, 1.442695
    %v681 = vpow.pop %v680
    %v682 = vmul.f32 %v636, 1.442695
    %v683 = vpow.pop %v682
    %v684 = vmul.f32 %v637, 1.442695
    %v685 = vpow.pop %v684
    %v686 = vmul.f32 %v638, 1.442695
    %v687 = vpow.pop %v686
    %v688 = vmul.f32 %v639, 1.442695
    %v689 = vpow.pop %v688
    %v690 = vmul.f32 %v640, 1.442695
    %v691 = vpow.pop %v690
    %v692 = vmul.f32 %v641, 1.442695
    %v693 = vpow.pop %v692
    %v694 = vmul.f32 %v642, 1.442695
    %v695 = vpow.pop %v694
    %v696 = vmul.f32 %v643, 1.442695
    %v697 = vpow.pop %v696
    %v698 = vmul.f32 %v644, 1.442695
    %v699 = vpow.pop %v698
    %v700 = vmul.f32 %v645, 1.442695
    %v701 = vpow.pop %v700
    %v702 = vmul.f32 %v646, 1.442695
    %v703 = vpow.pop %v702
    %v704 = vmul.f32 %v647, 1.442695
    %v705 = vpow.pop %v704
    %v706 = vmul.f32 %v648, 1.442695
    %v707 = vpow.pop %v706
    %v708 = vmul.f32 %v649, 1.442695
    %v709 = vpow.pop %v708
    %v710 = vmul.f32 %v650, 1.442695
    %v711 = vpow.pop %v710
    %v712 = vmul.f32 %v651, 1.442695
    %v713 = vpow.pop %v712
    %v714 = vmul.f32 %v652, 1.442695
    %v715 = vpow.pop %v714
    %v716 = vmul.f32 %v653, 1.442695
    %v717 = vpow.pop %v716
    %718 = vadd.xlane.f32.xlu0 %v655
    %v719 = vpop.xlane.xlu0 %718
    %720 = vadd.xlane.f32.xlu0 %v657
    %v721 = vpop.xlane.xlu0 %720
    %722 = vadd.xlane.f32.xlu0 %v659
    %v723 = vpop.xlane.xlu0 %722
    %724 = vadd.xlane.f32.xlu0 %v661
    %v725 = vpop.xlane.xlu0 %724
    %726 = vadd.xlane.f32.xlu0 %v663
    %v727 = vpop.xlane.xlu0 %726
    %728 = vadd.xlane.f32.xlu0 %v665
    %v729 = vpop.xlane.xlu0 %728
    %730 = vadd.xlane.f32.xlu0 %v667
    %v731 = vpop.xlane.xlu0 %730
    %732 = vadd.xlane.f32.xlu0 %v669
    %v733 = vpop.xlane.xlu0 %732
    %734 = vadd.xlane.f32.xlu0 %v671
    %v735 = vpop.xlane.xlu0 %734
    %736 = vadd.xlane.f32.xlu0 %v673
    %v737 = vpop.xlane.xlu0 %736
    %738 = vadd.xlane.f32.xlu0 %v675
    %v739 = vpop.xlane.xlu0 %738
    %740 = vadd.xlane.f32.xlu0 %v677
    %v741 = vpop.xlane.xlu0 %740
    %742 = vadd.xlane.f32.xlu0 %v679
    %v743 = vpop.xlane.xlu0 %742
    %744 = vadd.xlane.f32.xlu0 %v681
    %v745 = vpop.xlane.xlu0 %744
    %746 = vadd.xlane.f32.xlu0 %v683
    %v747 = vpop.xlane.xlu0 %746
    %748 = vadd.xlane.f32.xlu0 %v685
    %v749 = vpop.xlane.xlu0 %748
    %750 = vadd.xlane.f32.xlu0 %v687
    %v751 = vpop.xlane.xlu0 %750
    %752 = vadd.xlane.f32.xlu0 %v689
    %v753 = vpop.xlane.xlu0 %752
    %754 = vadd.xlane.f32.xlu0 %v691
    %v755 = vpop.xlane.xlu0 %754
    %756 = vadd.xlane.f32.xlu0 %v693
    %v757 = vpop.xlane.xlu0 %756
    %758 = vadd.xlane.f32.xlu0 %v695
    %v759 = vpop.xlane.xlu0 %758
    %760 = vadd.xlane.f32.xlu0 %v697
    %v761 = vpop.xlane.xlu0 %760
    %762 = vadd.xlane.f32.xlu0 %v699
    %v763 = vpop.xlane.xlu0 %762
    %764 = vadd.xlane.f32.xlu0 %v701
    %v765 = vpop.xlane.xlu0 %764
    %766 = vadd.xlane.f32.xlu0 %v703
    %v767 = vpop.xlane.xlu0 %766
    %768 = vadd.xlane.f32.xlu0 %v705
    %v769 = vpop.xlane.xlu0 %768
    %770 = vadd.xlane.f32.xlu0 %v707
    %v771 = vpop.xlane.xlu0 %770
    %772 = vadd.xlane.f32.xlu0 %v709
    %v773 = vpop.xlane.xlu0 %772
    %774 = vadd.xlane.f32.xlu0 %v711
    %v775 = vpop.xlane.xlu0 %774
    %776 = vadd.xlane.f32.xlu0 %v713
    %v777 = vpop.xlane.xlu0 %776
    %778 = vadd.xlane.f32.xlu0 %v715
    %v779 = vpop.xlane.xlu0 %778
    %780 = vadd.xlane.f32.xlu0 %v717
    %v781 = vpop.xlane.xlu0 %780
    %v782 = vlog2.pop %v719
    %v783 = vmul.f32 %v782, 0.6931472
    %v784 = vlog2.pop %v721
    %v785 = vmul.f32 %v784, 0.6931472
    %v786 = vlog2.pop %v723
    %v787 = vmul.f32 %v786, 0.6931472
    %v788 = vlog2.pop %v725
    %v789 = vmul.f32 %v788, 0.6931472
    %v790 = vlog2.pop %v727
    %v791 = vmul.f32 %v790, 0.6931472
    %v792 = vlog2.pop %v729
    %v793 = vmul.f32 %v792, 0.6931472
    %v794 = vlog2.pop %v731
    %v795 = vmul.f32 %v794, 0.6931472
    %v796 = vlog2.pop %v733
    %v797 = vmul.f32 %v796, 0.6931472
    %v798 = vlog2.pop %v735
    %v799 = vmul.f32 %v798, 0.6931472
    %v800 = vlog2.pop %v737
    %v801 = vmul.f32 %v800, 0.6931472
    %v802 = vlog2.pop %v739
    %v803 = vmul.f32 %v802, 0.6931472
    %v804 = vlog2.pop %v741
    %v805 = vmul.f32 %v804, 0.6931472
    %v806 = vlog2.pop %v743
    %v807 = vmul.f32 %v806, 0.6931472
    %v808 = vlog2.pop %v745
    %v809 = vmul.f32 %v808, 0.6931472
    %v810 = vlog2.pop %v747
    %v811 = vmul.f32 %v810, 0.6931472
    %v812 = vlog2.pop %v749
    %v813 = vmul.f32 %v812, 0.6931472
    %v814 = vlog2.pop %v751
    %v815 = vmul.f32 %v814, 0.6931472
    %v816 = vlog2.pop %v753
    %v817 = vmul.f32 %v816, 0.6931472
    %v818 = vlog2.pop %v755
    %v819 = vmul.f32 %v818, 0.6931472
    %v820 = vlog2.pop %v757
    %v821 = vmul.f32 %v820, 0.6931472
    %v822 = vlog2.pop %v759
    %v823 = vmul.f32 %v822, 0.6931472
    %v824 = vlog2.pop %v761
    %v825 = vmul.f32 %v824, 0.6931472
    %v826 = vlog2.pop %v763
    %v827 = vmul.f32 %v826, 0.6931472
    %v828 = vlog2.pop %v765
    %v829 = vmul.f32 %v828, 0.6931472
    %v830 = vlog2.pop %v767
    %v831 = vmul.f32 %v830, 0.6931472
    %v832 = vlog2.pop %v769
    %v833 = vmul.f32 %v832, 0.6931472
    %v834 = vlog2.pop %v771
    %v835 = vmul.f32 %v834, 0.6931472
    %v836 = vlog2.pop %v773
    %v837 = vmul.f32 %v836, 0.6931472
    %v838 = vlog2.pop %v775
    %v839 = vmul.f32 %v838, 0.6931472
    %v840 = vlog2.pop %v777
    %v841 = vmul.f32 %v840, 0.6931472
    %v842 = vlog2.pop %v779
    %v843 = vmul.f32 %v842, 0.6931472
    %v844 = vlog2.pop %v781
    %v845 = vmul.f32 %v844, 0.6931472
    %v846 = vsub.f32 %v622, %v783
    %v847 = vsub.f32 %v623, %v785
    %v848 = vsub.f32 %v624, %v787
    %v849 = vsub.f32 %v625, %v789
    %v850 = vsub.f32 %v626, %v791
    %v851 = vsub.f32 %v627, %v793
    %v852 = vsub.f32 %v628, %v795
    %v853 = vsub.f32 %v629, %v797
    %v854 = vsub.f32 %v630, %v799
    %v855 = vsub.f32 %v631, %v801
    %v856 = vsub.f32 %v632, %v803
    %v857 = vsub.f32 %v633, %v805
    %v858 = vsub.f32 %v634, %v807
    %v859 = vsub.f32 %v635, %v809
    %v860 = vsub.f32 %v636, %v811
    %v861 = vsub.f32 %v637, %v813
    %v862 = vsub.f32 %v638, %v815
    %v863 = vsub.f32 %v639, %v817
    %v864 = vsub.f32 %v640, %v819
    %v865 = vsub.f32 %v641, %v821
    %v866 = vsub.f32 %v642, %v823
    %v867 = vsub.f32 %v643, %v825
    %v868 = vsub.f32 %v644, %v827
    %v869 = vsub.f32 %v645, %v829
    %v870 = vsub.f32 %v646, %v831
    %v871 = vsub.f32 %v647, %v833
    %v872 = vsub.f32 %v648, %v835
    %v873 = vsub.f32 %v649, %v837
    %v874 = vsub.f32 %v650, %v839
    %v875 = vsub.f32 %v651, %v841
    %v876 = vsub.f32 %v652, %v843
    %v877 = vsub.f32 %v653, %v845
    %878 = vst [vmem:[%s3] sm:$0xff] %v846
    %879 = vst [vmem:[%s3 + $0x8] sm:$0xff] %v847
    %880 = vst [vmem:[%s3 + $0x10] sm:$0xff] %v848
    %881 = vst [vmem:[%s3 + $0x18] sm:$0xff] %v849
    %882 = vst [vmem:[%s3 + $0x20] sm:$0xff] %v850
    %883 = vst [vmem:[%s3 + $0x28] sm:$0xff] %v851
    %884 = vst [vmem:[%s3 + $0x30] sm:$0xff] %v852
    %885 = vst [vmem:[%s3 + $0x38] sm:$0xff] %v853
    %886 = vst [vmem:[%s3 + $0x40] sm:$0xff] %v854
    %887 = vst [vmem:[%s3 + $0x48] sm:$0xff] %v855
    %888 = vst [vmem:[%s3 + $0x50] sm:$0xff] %v856
    %889 = vst [vmem:[%s3 + $0x58] sm:$0xff] %v857
    %890 = vst [vmem:[%s3 + $0x60] sm:$0xff] %v858
    %891 = vst [vmem:[%s3 + $0x68] sm:$0xff] %v859
    %892 = vst [vmem:[%s3 + $0x70] sm:$0xff] %v860
    %893 = vst [vmem:[%s3 + $0x78] sm:$0xff] %v861
    %894 = vst [vmem:[%s3 + $0x80] sm:$0xff] %v862
    %895 = vst [vmem:[%s3 + $0x88] sm:$0xff] %v863
    %896 = vst [vmem:[%s3 + $0x90] sm:$0xff] %v864
    %897 = vst [vmem:[%s3 + $0x98] sm:$0xff] %v865
    %898 = vst [vmem:[%s3 + $0xa0] sm:$0xff] %v866
    %899 = vst [vmem:[%s3 + $0xa8] sm:$0xff] %v867
    %900 = vst [vmem:[%s3 + $0xb0] sm:$0xff] %v868
    %901 = vst [vmem:[%s3 + $0xb8] sm:$0xff] %v869
    %902 = vst [vmem:[%s3 + $0xc0] sm:$0xff] %v870
    %903 = vst [vmem:[%s3 + $0xc8] sm:$0xff] %v871
    %904 = vst [vmem:[%s3 + $0xd0] sm:$0xff] %v872
    %905 = vst [vmem:[%s3 + $0xd8] sm:$0xff] %v873
    %906 = vst [vmem:[%s3 + $0xe0] sm:$0xff] %v874
    %907 = vst [vmem:[%s3 + $0xe8] sm:$0xff] %v875
    %908 = vst [vmem:[%s3 + $0xf0] sm:$0xff] %v876
    %909 = vst [vmem:[%s3 + $0xf8] sm:$0xff] %v877
  $region21: #{gcn_forward.3} parent=0 // pred_fallthru
    _
  // Predicated region
  $region22: #{gcn_forward.3} parent=0 // pred_check
    _
  $region23: #{gcn_forward.3} parent=0 // pred_check_branch
    %911 = sbr.rel (0) target = $region25
  $region24: #{gcn_forward.3} parent=0 // pred_region
    _
  $region25: #{gcn_forward.3} parent=0 // pred_fallthru
    _
  // Predicated region
  $region26: #{gcn_forward.3} parent=0 // pred_check
    _
  $region27: #{gcn_forward.3} parent=0 // pred_check_branch
    %913 = sbr.rel (0) target = $region29
  $region28: #{gcn_forward.3} parent=0 // pred_region
    _
  $region29: #{gcn_forward.3} parent=0 // pred_fallthru
    _

// kernel: gcn_forward.2
$region0: #{gcn_forward.2}
  #allocation0 [shape = 'u32[]', space=smem, size = 0x4, offset = 0x4, fixed_abs, tag = 'smem constant byte address 0x4 - core index']
  #allocation1 [shape = 'u32[144,128]{1,0:T(1,128)}', space=vmem, size = 0x12000, scoped, tag = 'internal scratch']
  #allocation2 [shape = 'f32[256,128]{1,0:T(8,128)}', space=vmem, size = 0x20000, scoped, tag = 'scratch operand']
  %s0 = inlined_call_operand.vmem [shape: s8[256,256], index: 0, kind: input, shape index: {}]
  %s1 = inlined_call_operand.vmem [shape: bf16[256,128], index: 1, kind: input, shape index: {}]
  %s2 = inlined_call_operand.vmem [shape: f32[1,128], index: 2, kind: input, shape index: {}]
  %s3 = inlined_call_operand.vmem [shape: bf16[128,128], index: 3, kind: input, shape index: {}]
  %s4 = inlined_call_operand.vmem [shape: bf16[256,128], index: 4, kind: output, shape index: {}]
  %s5 = sld [smem:[#allocation0]]
  $region34: #{gcn_forward.2} parent=0
    _
  %s7 = ssub.s32 1, %s5
  %s8 = scalar_select 0, %s7, %s5
  // Predicated region
  $region2: #{gcn_forward.2} parent=0 // pred_check
    _
  $region3: #{gcn_forward.2} parent=0 // pred_check_branch
    %10 = sbr.rel (0) target = $region5
  $region4: #{gcn_forward.2} parent=0 // pred_region
    _
  $region5: #{gcn_forward.2} parent=0 // pred_fallthru
    _
  // Predicated region
  $region6: #{gcn_forward.2} parent=0 // pred_check
    _
  $region7: #{gcn_forward.2} parent=0 // pred_check_branch
    %12 = sbr.rel (0) target = $region9
  $region8: #{gcn_forward.2} parent=0 // pred_region
    _
  $region9: #{gcn_forward.2} parent=0 // pred_fallthru
    _
  // Predicated region
  $region10: #{gcn_forward.2} parent=0 // pred_check
    _
  $region11: #{gcn_forward.2} parent=0 // pred_check_branch
    %14 = sbr.rel (0) target = $region13
  $region12: #{gcn_forward.2} parent=0 // pred_region
    _
  $region13: #{gcn_forward.2} parent=0 // pred_fallthru
    _
  // Predicated region
  $region14: #{gcn_forward.2} parent=0 // pred_check
    _
  $region15: #{gcn_forward.2} parent=0 // pred_check_branch
    %16 = sbr.rel (0) target = $region17
  $region16: #{gcn_forward.2} parent=0 // pred_region
    _
  $region17: #{gcn_forward.2} parent=0 // pred_fallthru
    _
  %p18 = scmp.eq.s32.totalorder 0, 0
  // Predicated region
  $region18: #{gcn_forward.2} parent=0 // pred_check
    %p19 = pneg %p18
  $region19: #{gcn_forward.2} parent=0 // pred_check_branch
    %21 = sbr.rel (%p19) target = $region21
  $region20: #{gcn_forward.2} parent=0 // pred_region
    %22 = vst [vmem:[#allocation2] sm:$0xff] 0.0
    %23 = vst [vmem:[#allocation2 + $0x8] sm:$0xff] 0.0
    %24 = vst [vmem:[#allocation2 + $0x10] sm:$0xff] 0.0
    %25 = vst [vmem:[#allocation2 + $0x18] sm:$0xff] 0.0
    %26 = vst [vmem:[#allocation2 + $0x20] sm:$0xff] 0.0
    %27 = vst [vmem:[#allocation2 + $0x28] sm:$0xff] 0.0
    %28 = vst [vmem:[#allocation2 + $0x30] sm:$0xff] 0.0
    %29 = vst [vmem:[#allocation2 + $0x38] sm:$0xff] 0.0
    %30 = vst [vmem:[#allocation2 + $0x40] sm:$0xff] 0.0
    %31 = vst [vmem:[#allocation2 + $0x48] sm:$0xff] 0.0
    %32 = vst [vmem:[#allocation2 + $0x50] sm:$0xff] 0.0
    %33 = vst [vmem:[#allocation2 + $0x58] sm:$0xff] 0.0
    %34 = vst [vmem:[#allocation2 + $0x60] sm:$0xff] 0.0
    %35 = vst [vmem:[#allocation2 + $0x68] sm:$0xff] 0.0
    %36 = vst [vmem:[#allocation2 + $0x70] sm:$0xff] 0.0
    %37 = vst [vmem:[#allocation2 + $0x78] sm:$0xff] 0.0
    %38 = vst [vmem:[#allocation2 + $0x80] sm:$0xff] 0.0
    %39 = vst [vmem:[#allocation2 + $0x88] sm:$0xff] 0.0
    %40 = vst [vmem:[#allocation2 + $0x90] sm:$0xff] 0.0
    %41 = vst [vmem:[#allocation2 + $0x98] sm:$0xff] 0.0
    %42 = vst [vmem:[#allocation2 + $0xa0] sm:$0xff] 0.0
    %43 = vst [vmem:[#allocation2 + $0xa8] sm:$0xff] 0.0
    %44 = vst [vmem:[#allocation2 + $0xb0] sm:$0xff] 0.0
    %45 = vst [vmem:[#allocation2 + $0xb8] sm:$0xff] 0.0
    %46 = vst [vmem:[#allocation2 + $0xc0] sm:$0xff] 0.0
    %47 = vst [vmem:[#allocation2 + $0xc8] sm:$0xff] 0.0
    %48 = vst [vmem:[#allocation2 + $0xd0] sm:$0xff] 0.0
    %49 = vst [vmem:[#allocation2 + $0xd8] sm:$0xff] 0.0
    %50 = vst [vmem:[#allocation2 + $0xe0] sm:$0xff] 0.0
    %51 = vst [vmem:[#allocation2 + $0xe8] sm:$0xff] 0.0
    %52 = vst [vmem:[#allocation2 + $0xf0] sm:$0xff] 0.0
    %53 = vst [vmem:[#allocation2 + $0xf8] sm:$0xff] 0.0
  $region21: #{gcn_forward.2} parent=0 // pred_fallthru
    _
  %v54 = vld [vmem:[%s0] sm:$0xff]
  %v55 = vld [vmem:[%s0 + $0x8] sm:$0xff]
  %v56 = vld [vmem:[%s0 + $0x10] sm:$0xff]
  %v57 = vld [vmem:[%s0 + $0x18] sm:$0xff]
  %v58 = vld [vmem:[%s0 + $0x20] sm:$0xff]
  %v59 = vld [vmem:[%s0 + $0x28] sm:$0xff]
  %v60 = vld [vmem:[%s0 + $0x30] sm:$0xff]
  %v61 = vld [vmem:[%s0 + $0x38] sm:$0xff]
  %v62 = vld [vmem:[%s0 + $0x40] sm:$0xff]
  %v63 = vld [vmem:[%s0 + $0x48] sm:$0xff]
  %v64 = vld [vmem:[%s0 + $0x50] sm:$0xff]
  %v65 = vld [vmem:[%s0 + $0x58] sm:$0xff]
  %v66 = vld [vmem:[%s0 + $0x60] sm:$0xff]
  %v67 = vld [vmem:[%s0 + $0x68] sm:$0xff]
  %v68 = vld [vmem:[%s0 + $0x70] sm:$0xff]
  %v69 = vld [vmem:[%s0 + $0x78] sm:$0xff]
  %v70 = vunpack.c.l.s8.bf16 %v54
  %v71 = vunpack.c.l.s8.bf16 %v55
  %v72 = vunpack.c.h.s8.bf16 %v54
  %v73 = vunpack.c.h.s8.bf16 %v55
  %v74 = vunpack.c.l.s8.bf16 %v56
  %v75 = vunpack.c.l.s8.bf16 %v57
  %v76 = vunpack.c.h.s8.bf16 %v56
  %v77 = vunpack.c.h.s8.bf16 %v57
  %v78 = vunpack.c.l.s8.bf16 %v58
  %v79 = vunpack.c.l.s8.bf16 %v59
  %v80 = vunpack.c.h.s8.bf16 %v58
  %v81 = vunpack.c.h.s8.bf16 %v59
  %v82 = vunpack.c.l.s8.bf16 %v60
  %v83 = vunpack.c.l.s8.bf16 %v61
  %v84 = vunpack.c.h.s8.bf16 %v60
  %v85 = vunpack.c.h.s8.bf16 %v61
  %v86 = vunpack.c.l.s8.bf16 %v62
  %v87 = vunpack.c.l.s8.bf16 %v63
  %v88 = vunpack.c.h.s8.bf16 %v62
  %v89 = vunpack.c.h.s8.bf16 %v63
  %v90 = vunpack.c.l.s8.bf16 %v64
  %v91 = vunpack.c.l.s8.bf16 %v65
  %v92 = vunpack.c.h.s8.bf16 %v64
  %v93 = vunpack.c.h.s8.bf16 %v65
  %v94 = vunpack.c.l.s8.bf16 %v66
  %v95 = vunpack.c.l.s8.bf16 %v67
  %v96 = vunpack.c.h.s8.bf16 %v66
  %v97 = vunpack.c.h.s8.bf16 %v67
  %v98 = vunpack.c.l.s8.bf16 %v68
  %v99 = vunpack.c.l.s8.bf16 %v69
  %v100 = vunpack.c.h.s8.bf16 %v68
  %v101 = vunpack.c.h.s8.bf16 %v69
  %v102 = vld [vmem:[#allocation2] sm:$0xff]
  %v103 = vld [vmem:[#allocation2 + $0x8] sm:$0xff]
  %v104 = vld [vmem:[#allocation2 + $0x10] sm:$0xff]
  %v105 = vld [vmem:[#allocation2 + $0x18] sm:$0xff]
  %v106 = vld [vmem:[#allocation2 + $0x20] sm:$0xff]
  %v107 = vld [vmem:[#allocation2 + $0x28] sm:$0xff]
  %v108 = vld [vmem:[#allocation2 + $0x30] sm:$0xff]
  %v109 = vld [vmem:[#allocation2 + $0x38] sm:$0xff]
  %v110 = vld [vmem:[#allocation2 + $0x40] sm:$0xff]
  %v111 = vld [vmem:[#allocation2 + $0x48] sm:$0xff]
  %v112 = vld [vmem:[#allocation2 + $0x50] sm:$0xff]
  %v113 = vld [vmem:[#allocation2 + $0x58] sm:$0xff]
  %v114 = vld [vmem:[#allocation2 + $0x60] sm:$0xff]
  %v115 = vld [vmem:[#allocation2 + $0x68] sm:$0xff]
  %v116 = vld [vmem:[#allocation2 + $0x70] sm:$0xff]
  %v117 = vld [vmem:[#allocation2 + $0x78] sm:$0xff]
  %v118 = vld [vmem:[#allocation2 + $0x80] sm:$0xff]
  %v119 = vld [vmem:[#allocation2 + $0x88] sm:$0xff]
  %v120 = vld [vmem:[#allocation2 + $0x90] sm:$0xff]
  %v121 = vld [vmem:[#allocation2 + $0x98] sm:$0xff]
  %v122 = vld [vmem:[#allocation2 + $0xa0] sm:$0xff]
  %v123 = vld [vmem:[#allocation2 + $0xa8] sm:$0xff]
  %v124 = vld [vmem:[#allocation2 + $0xb0] sm:$0xff]
  %v125 = vld [vmem:[#allocation2 + $0xb8] sm:$0xff]
  %v126 = vld [vmem:[#allocation2 + $0xc0] sm:$0xff]
  %v127 = vld [vmem:[#allocation2 + $0xc8] sm:$0xff]
  %v128 = vld [vmem:[#allocation2 + $0xd0] sm:$0xff]
  %v129 = vld [vmem:[#allocation2 + $0xd8] sm:$0xff]
  %v130 = vld [vmem:[#allocation2 + $0xe0] sm:$0xff]
  %v131 = vld [vmem:[#allocation2 + $0xe8] sm:$0xff]
  %v132 = vld [vmem:[#allocation2 + $0xf0] sm:$0xff]
  %v133 = vld [vmem:[#allocation2 + $0xf8] sm:$0xff]
  %v134 = vld [vmem:[%s1] sm:$0xf]
  %v135 = vld [vmem:[%s1 + $0x4] sm:$0xf]
  %v136 = vld [vmem:[%s1 + $0x8] sm:$0xf]
  %v137 = vld [vmem:[%s1 + $0xc] sm:$0xf]
  %v138 = vld [vmem:[%s1 + $0x10] sm:$0xf]
  %v139 = vld [vmem:[%s1 + $0x14] sm:$0xf]
  %v140 = vld [vmem:[%s1 + $0x18] sm:$0xf]
  %v141 = vld [vmem:[%s1 + $0x1c] sm:$0xf]
  %v142 = vld [vmem:[%s1 + $0x20] sm:$0xf]
  %v143 = vld [vmem:[%s1 + $0x24] sm:$0xf]
  %v144 = vld [vmem:[%s1 + $0x28] sm:$0xf]
  %v145 = vld [vmem:[%s1 + $0x2c] sm:$0xf]
  %v146 = vld [vmem:[%s1 + $0x30] sm:$0xf]
  %v147 = vld [vmem:[%s1 + $0x34] sm:$0xf]
  %v148 = vld [vmem:[%s1 + $0x38] sm:$0xf]
  %v149 = vld [vmem:[%s1 + $0x3c] sm:$0xf]
  %v150 = vld [vmem:[%s1 + $0x40] sm:$0xf]
  %v151 = vld [vmem:[%s1 + $0x44] sm:$0xf]
  %v152 = vld [vmem:[%s1 + $0x48] sm:$0xf]
  %v153 = vld [vmem:[%s1 + $0x4c] sm:$0xf]
  %v154 = vld [vmem:[%s1 + $0x50] sm:$0xf]
  %v155 = vld [vmem:[%s1 + $0x54] sm:$0xf]
  %v156 = vld [vmem:[%s1 + $0x58] sm:$0xf]
  %v157 = vld [vmem:[%s1 + $0x5c] sm:$0xf]
  %v158 = vld [vmem:[%s1 + $0x60] sm:$0xf]
  %v159 = vld [vmem:[%s1 + $0x64] sm:$0xf]
  %v160 = vld [vmem:[%s1 + $0x68] sm:$0xf]
  %v161 = vld [vmem:[%s1 + $0x6c] sm:$0xf]
  %v162 = vld [vmem:[%s1 + $0x70] sm:$0xf]
  %v163 = vld [vmem:[%s1 + $0x74] sm:$0xf]
  %v164 = vld [vmem:[%s1 + $0x78] sm:$0xf]
  %v165 = vld [vmem:[%s1 + $0x7c] sm:$0xf]
  %v198 = vunpack.c.l.b16 %v134
  %v199 = vunpack.c.l.b16 %v135
  %v200 = vunpack.c.l.b16 %v136
  %v201 = vunpack.c.l.b16 %v137
  %v202 = vunpack.c.l.b16 %v138
  %v203 = vunpack.c.l.b16 %v139
  %v204 = vunpack.c.l.b16 %v140
  %v205 = vunpack.c.l.b16 %v141
  %v206 = vunpack.c.l.b16 %v142
  %v207 = vunpack.c.l.b16 %v143
  %v208 = vunpack.c.l.b16 %v144
  %v209 = vunpack.c.l.b16 %v145
  %v210 = vunpack.c.l.b16 %v146
  %v211 = vunpack.c.l.b16 %v147
  %v212 = vunpack.c.l.b16 %v148
  %v213 = vunpack.c.l.b16 %v149
  %v214 = vunpack.c.l.b16 %v150
  %v215 = vunpack.c.l.b16 %v151
  %v216 = vunpack.c.l.b16 %v152
  %v217 = vunpack.c.l.b16 %v153
  %v218 = vunpack.c.l.b16 %v154
  %v219 = vunpack.c.l.b16 %v155
  %v220 = vunpack.c.l.b16 %v156
  %v221 = vunpack.c.l.b16 %v157
  %v222 = vunpack.c.l.b16 %v158
  %v223 = vunpack.c.l.b16 %v159
  %v224 = vunpack.c.l.b16 %v160
  %v225 = vunpack.c.l.b16 %v161
  %v226 = vunpack.c.l.b16 %v162
  %v227 = vunpack.c.l.b16 %v163
  %v228 = vunpack.c.l.b16 %v164
  %v229 = vunpack.c.l.b16 %v165
  %v230 = vpack.c.b16 %v199, %v198
  %v231 = vpack.c.b16 %v201, %v200
  %v232 = vpack.c.b16 %v203, %v202
  %v233 = vpack.c.b16 %v205, %v204
  %v234 = vpack.c.b16 %v207, %v206
  %v235 = vpack.c.b16 %v209, %v208
  %v236 = vpack.c.b16 %v211, %v210
  %v237 = vpack.c.b16 %v213, %v212
  %v238 = vpack.c.b16 %v215, %v214
  %v239 = vpack.c.b16 %v217, %v216
  %v240 = vpack.c.b16 %v219, %v218
  %v241 = vpack.c.b16 %v221, %v220
  %v242 = vpack.c.b16 %v223, %v222
  %v243 = vpack.c.b16 %v225, %v224
  %v244 = vpack.c.b16 %v227, %v226
  %v245 = vpack.c.b16 %v229, %v228
  %262 = vmatprep.subr.bf16.mxu0 0
  %263 = vmatpush1.bf16.msra.mxu0 %v237
  %264 = vmatprep.subr.bf16.mxu0 0
  %265 = vmatpush1.bf16.msra.mxu0 %v236
  %266 = vmatprep.subr.bf16.mxu0 0
  %267 = vmatpush1.bf16.msra.mxu0 %v235
  %268 = vmatprep.subr.bf16.mxu0 0
  %269 = vmatpush1.bf16.msra.mxu0 %v234
  %270 = vmatprep.subr.bf16.mxu0 0
  %271 = vmatpush1.bf16.msra.mxu0 %v233
  %272 = vmatprep.subr.bf16.mxu0 0
  %273 = vmatpush1.bf16.msra.mxu0 %v232
  %274 = vmatprep.subr.bf16.mxu0 0
  %275 = vmatpush1.bf16.msra.mxu0 %v231
  %276 = vmatprep.subr.bf16.mxu0 0
  %277 = vmatpush1.bf16.msra.mxu0 %v230
  %278 = vmatprep.subr.bf16.mxu0 0
  %279 = vmatpush2.bf16.msra.mxu0 %v245
  %280 = vmatprep.subr.bf16.mxu0 0
  %281 = vmatpush2.bf16.msra.mxu0 %v244
  %282 = vmatprep.subr.bf16.mxu0 0
  %283 = vmatpush2.bf16.msra.mxu0 %v243
  %284 = vmatprep.subr.bf16.mxu0 0
  %285 = vmatpush2.bf16.msra.mxu0 %v242
  %286 = vmatprep.subr.bf16.mxu0 0
  %287 = vmatpush2.bf16.msra.mxu0 %v241
  %288 = vmatprep.subr.bf16.mxu0 0
  %289 = vmatpush2.bf16.msra.mxu0 %v240
  %290 = vmatprep.subr.bf16.mxu0 0
  %291 = vmatpush2.bf16.msra.mxu0 %v239
  %292 = vmatprep.subr.bf16.mxu0 0
  %293 = vmatpush2.bf16.msra.mxu0 %v238
  %294 = vmatprep.mubr.bf16.mxu0 %v71
  %295 = vmatmul.mubr.bf16.gmra.mxu0 %v70
  %v296 = vpop.f32.mrf.mxu0
  %v297 = vadd.f32 0.0, %v296
  %v298 = vpop.f32.mrf.mxu0
  %v299 = vpop.f32.mrf.mxu0
  %v300 = vadd.f32 0.0, %v299
  %v301 = vpop.f32.mrf.mxu0
  %302 = vmatprep.mubr.bf16.mxu0 %v73
  %303 = vmatmul.mubr.bf16.gmra.mxu0 %v72
  %v304 = vpop.f32.mrf.mxu0
  %v305 = vadd.f32 0.0, %v304
  %v306 = vpop.f32.mrf.mxu0
  %v307 = vpop.f32.mrf.mxu0
  %v308 = vadd.f32 0.0, %v307
  %v309 = vpop.f32.mrf.mxu0
  %310 = vmatprep.mubr.bf16.mxu0 %v75
  %311 = vmatmul.mubr.bf16.gmra.mxu0 %v74
  %v312 = vpop.f32.mrf.mxu0
  %v313 = vadd.f32 0.0, %v312
  %v314 = vpop.f32.mrf.mxu0
  %v315 = vpop.f32.mrf.mxu0
  %v316 = vadd.f32 0.0, %v315
  %v317 = vpop.f32.mrf.mxu0
  %318 = vmatprep.mubr.bf16.mxu0 %v77
  %319 = vmatmul.mubr.bf16.gmra.mxu0 %v76
  %v320 = vpop.f32.mrf.mxu0
  %v321 = vadd.f32 0.0, %v320
  %v322 = vpop.f32.mrf.mxu0
  %v323 = vpop.f32.mrf.mxu0
  %v324 = vadd.f32 0.0, %v323
  %v325 = vpop.f32.mrf.mxu0
  %326 = vmatprep.mubr.bf16.mxu0 %v79
  %327 = vmatmul.mubr.bf16.gmra.mxu0 %v78
  %v328 = vpop.f32.mrf.mxu0
  %v329 = vadd.f32 0.0, %v328
  %v330 = vpop.f32.mrf.mxu0
  %v331 = vpop.f32.mrf.mxu0
  %v332 = vadd.f32 0.0, %v331
  %v333 = vpop.f32.mrf.mxu0
  %334 = vmatprep.mubr.bf16.mxu0 %v81
  %335 = vmatmul.mubr.bf16.gmra.mxu0 %v80
  %v336 = vpop.f32.mrf.mxu0
  %v337 = vadd.f32 0.0, %v336
  %v338 = vpop.f32.mrf.mxu0
  %v339 = vpop.f32.mrf.mxu0
  %v340 = vadd.f32 0.0, %v339
  %v341 = vpop.f32.mrf.mxu0
  %342 = vmatprep.mubr.bf16.mxu0 %v83
  %343 = vmatmul.mubr.bf16.gmra.mxu0 %v82
  %v344 = vpop.f32.mrf.mxu0
  %v345 = vadd.f32 0.0, %v344
  %v346 = vpop.f32.mrf.mxu0
  %v347 = vpop.f32.mrf.mxu0
  %v348 = vadd.f32 0.0, %v347
  %v349 = vpop.f32.mrf.mxu0
  %350 = vmatprep.mubr.bf16.mxu0 %v85
  %351 = vmatmul.mubr.bf16.gmra.mxu0 %v84
  %v352 = vpop.f32.mrf.mxu0
  %v353 = vadd.f32 0.0, %v352
  %v354 = vpop.f32.mrf.mxu0
  %v355 = vpop.f32.mrf.mxu0
  %v356 = vadd.f32 0.0, %v355
  %v357 = vpop.f32.mrf.mxu0
  %358 = vmatprep.mubr.bf16.mxu0 %v87
  %359 = vmatmul.mubr.bf16.gmra.mxu0 %v86
  %v360 = vpop.f32.mrf.mxu0
  %v361 = vadd.f32 0.0, %v360
  %v362 = vpop.f32.mrf.mxu0
  %v363 = vpop.f32.mrf.mxu0
  %v364 = vadd.f32 0.0, %v363
  %v365 = vpop.f32.mrf.mxu0
  %366 = vmatprep.mubr.bf16.mxu0 %v89
  %367 = vmatmul.mubr.bf16.gmra.mxu0 %v88
  %v368 = vpop.f32.mrf.mxu0
  %v369 = vadd.f32 0.0, %v368
  %v370 = vpop.f32.mrf.mxu0
  %v371 = vpop.f32.mrf.mxu0
  %v372 = vadd.f32 0.0, %v371
  %v373 = vpop.f32.mrf.mxu0
  %374 = vmatprep.mubr.bf16.mxu0 %v91
  %375 = vmatmul.mubr.bf16.gmra.mxu0 %v90
  %v376 = vpop.f32.mrf.mxu0
  %v377 = vadd.f32 0.0, %v376
  %v378 = vpop.f32.mrf.mxu0
  %v379 = vpop.f32.mrf.mxu0
  %v380 = vadd.f32 0.0, %v379
  %v381 = vpop.f32.mrf.mxu0
  %382 = vmatprep.mubr.bf16.mxu0 %v93
  %383 = vmatmul.mubr.bf16.gmra.mxu0 %v92
  %v384 = vpop.f32.mrf.mxu0
  %v385 = vadd.f32 0.0, %v384
  %v386 = vpop.f32.mrf.mxu0
  %v387 = vpop.f32.mrf.mxu0
  %v388 = vadd.f32 0.0, %v387
  %v389 = vpop.f32.mrf.mxu0
  %390 = vmatprep.mubr.bf16.mxu0 %v95
  %391 = vmatmul.mubr.bf16.gmra.mxu0 %v94
  %v392 = vpop.f32.mrf.mxu0
  %v393 = vadd.f32 0.0, %v392
  %v394 = vpop.f32.mrf.mxu0
  %v395 = vpop.f32.mrf.mxu0
  %v396 = vadd.f32 0.0, %v395
  %v397 = vpop.f32.mrf.mxu0
  %398 = vmatprep.mubr.bf16.mxu0 %v97
  %399 = vmatmul.mubr.bf16.gmra.mxu0 %v96
  %v400 = vpop.f32.mrf.mxu0
  %v401 = vadd.f32 0.0, %v400
  %v402 = vpop.f32.mrf.mxu0
  %v403 = vpop.f32.mrf.mxu0
  %v404 = vadd.f32 0.0, %v403
  %v405 = vpop.f32.mrf.mxu0
  %406 = vmatprep.mubr.bf16.mxu0 %v99
  %407 = vmatmul.mubr.bf16.gmra.mxu0 %v98
  %v408 = vpop.f32.mrf.mxu0
  %v409 = vadd.f32 0.0, %v408
  %v410 = vpop.f32.mrf.mxu0
  %v411 = vpop.f32.mrf.mxu0
  %v412 = vadd.f32 0.0, %v411
  %v413 = vpop.f32.mrf.mxu0
  %414 = vmatprep.mubr.bf16.mxu0 %v101
  %415 = vmatmul.mubr.bf16.gmra.mxu0 %v100
  %v416 = vpop.f32.mrf.mxu0
  %v417 = vadd.f32 0.0, %v416
  %v418 = vpop.f32.mrf.mxu0
  %v419 = vpop.f32.mrf.mxu0
  %v420 = vadd.f32 0.0, %v419
  %v421 = vpop.f32.mrf.mxu0
  %422 = vdwg.mxu0
  %v423 = vadd.f32 %v102, %v297
  %v424 = vadd.f32 %v103, %v300
  %v425 = vadd.f32 %v104, %v305
  %v426 = vadd.f32 %v105, %v308
  %v427 = vadd.f32 %v106, %v313
  %v428 = vadd.f32 %v107, %v316
  %v429 = vadd.f32 %v108, %v321
  %v430 = vadd.f32 %v109, %v324
  %v431 = vadd.f32 %v110, %v329
  %v432 = vadd.f32 %v111, %v332
  %v433 = vadd.f32 %v112, %v337
  %v434 = vadd.f32 %v113, %v340
  %v435 = vadd.f32 %v114, %v345
  %v436 = vadd.f32 %v115, %v348
  %v437 = vadd.f32 %v116, %v353
  %v438 = vadd.f32 %v117, %v356
  %v439 = vadd.f32 %v118, %v361
  %v440 = vadd.f32 %v119, %v364
  %v441 = vadd.f32 %v120, %v369
  %v442 = vadd.f32 %v121, %v372
  %v443 = vadd.f32 %v122, %v377
  %v444 = vadd.f32 %v123, %v380
  %v445 = vadd.f32 %v124, %v385
  %v446 = vadd.f32 %v125, %v388
  %v447 = vadd.f32 %v126, %v393
  %v448 = vadd.f32 %v127, %v396
  %v449 = vadd.f32 %v128, %v401
  %v450 = vadd.f32 %v129, %v404
  %v451 = vadd.f32 %v130, %v409
  %v452 = vadd.f32 %v131, %v412
  %v453 = vadd.f32 %v132, %v417
  %v454 = vadd.f32 %v133, %v420
  %455 = vst [vmem:[#allocation2] sm:$0xff] %v423
  %456 = vst [vmem:[#allocation2 + $0x8] sm:$0xff] %v424
  %457 = vst [vmem:[#allocation2 + $0x10] sm:$0xff] %v425
  %458 = vst [vmem:[#allocation2 + $0x18] sm:$0xff] %v426
  %459 = vst [vmem:[#allocation2 + $0x20] sm:$0xff] %v427
  %460 = vst [vmem:[#allocation2 + $0x28] sm:$0xff] %v428
  %461 = vst [vmem:[#allocation2 + $0x30] sm:$0xff] %v429
  %462 = vst [vmem:[#allocation2 + $0x38] sm:$0xff] %v430
  %463 = vst [vmem:[#allocation2 + $0x40] sm:$0xff] %v431
  %464 = vst [vmem:[#allocation2 + $0x48] sm:$0xff] %v432
  %465 = vst [vmem:[#allocation2 + $0x50] sm:$0xff] %v433
  %466 = vst [vmem:[#allocation2 + $0x58] sm:$0xff] %v434
  %467 = vst [vmem:[#allocation2 + $0x60] sm:$0xff] %v435
  %468 = vst [vmem:[#allocation2 + $0x68] sm:$0xff] %v436
  %469 = vst [vmem:[#allocation2 + $0x70] sm:$0xff] %v437
  %470 = vst [vmem:[#allocation2 + $0x78] sm:$0xff] %v438
  %471 = vst [vmem:[#allocation2 + $0x80] sm:$0xff] %v439
  %472 = vst [vmem:[#allocation2 + $0x88] sm:$0xff] %v440
  %473 = vst [vmem:[#allocation2 + $0x90] sm:$0xff] %v441
  %474 = vst [vmem:[#allocation2 + $0x98] sm:$0xff] %v442
  %475 = vst [vmem:[#allocation2 + $0xa0] sm:$0xff] %v443
  %476 = vst [vmem:[#allocation2 + $0xa8] sm:$0xff] %v444
  %477 = vst [vmem:[#allocation2 + $0xb0] sm:$0xff] %v445
  %478 = vst [vmem:[#allocation2 + $0xb8] sm:$0xff] %v446
  %479 = vst [vmem:[#allocation2 + $0xc0] sm:$0xff] %v447
  %480 = vst [vmem:[#allocation2 + $0xc8] sm:$0xff] %v448
  %481 = vst [vmem:[#allocation2 + $0xd0] sm:$0xff] %v449
  %482 = vst [vmem:[#allocation2 + $0xd8] sm:$0xff] %v450
  %483 = vst [vmem:[#allocation2 + $0xe0] sm:$0xff] %v451
  %484 = vst [vmem:[#allocation2 + $0xe8] sm:$0xff] %v452
  %485 = vst [vmem:[#allocation2 + $0xf0] sm:$0xff] %v453
  %486 = vst [vmem:[#allocation2 + $0xf8] sm:$0xff] %v454
  // Predicated region
  $region22: #{gcn_forward.2} parent=0 // pred_check
    %p487 = pneg %p18
  $region23: #{gcn_forward.2} parent=0 // pred_check_branch
    %489 = sbr.rel (%p487) target = $region25
  $region24: #{gcn_forward.2} parent=0 // pred_region
    %v490 = vld [vmem:[#allocation2] sm:$0xff]
    %v491 = vld [vmem:[#allocation2 + $0x8] sm:$0xff]
    %v492 = vld [vmem:[#allocation2 + $0x10] sm:$0xff]
    %v493 = vld [vmem:[#allocation2 + $0x18] sm:$0xff]
    %v494 = vld [vmem:[#allocation2 + $0x20] sm:$0xff]
    %v495 = vld [vmem:[#allocation2 + $0x28] sm:$0xff]
    %v496 = vld [vmem:[#allocation2 + $0x30] sm:$0xff]
    %v497 = vld [vmem:[#allocation2 + $0x38] sm:$0xff]
    %v498 = vld [vmem:[#allocation2 + $0x40] sm:$0xff]
    %v499 = vld [vmem:[#allocation2 + $0x48] sm:$0xff]
    %v500 = vld [vmem:[#allocation2 + $0x50] sm:$0xff]
    %v501 = vld [vmem:[#allocation2 + $0x58] sm:$0xff]
    %v502 = vld [vmem:[#allocation2 + $0x60] sm:$0xff]
    %v503 = vld [vmem:[#allocation2 + $0x68] sm:$0xff]
    %v504 = vld [vmem:[#allocation2 + $0x70] sm:$0xff]
    %v505 = vld [vmem:[#allocation2 + $0x78] sm:$0xff]
    %v506 = vld [vmem:[#allocation2 + $0x80] sm:$0xff]
    %v507 = vld [vmem:[#allocation2 + $0x88] sm:$0xff]
    %v508 = vld [vmem:[#allocation2 + $0x90] sm:$0xff]
    %v509 = vld [vmem:[#allocation2 + $0x98] sm:$0xff]
    %v510 = vld [vmem:[#allocation2 + $0xa0] sm:$0xff]
    %v511 = vld [vmem:[#allocation2 + $0xa8] sm:$0xff]
    %v512 = vld [vmem:[#allocation2 + $0xb0] sm:$0xff]
    %v513 = vld [vmem:[#allocation2 + $0xb8] sm:$0xff]
    %v514 = vld [vmem:[#allocation2 + $0xc0] sm:$0xff]
    %v515 = vld [vmem:[#allocation2 + $0xc8] sm:$0xff]
    %v516 = vld [vmem:[#allocation2 + $0xd0] sm:$0xff]
    %v517 = vld [vmem:[#allocation2 + $0xd8] sm:$0xff]
    %v518 = vld [vmem:[#allocation2 + $0xe0] sm:$0xff]
    %v519 = vld [vmem:[#allocation2 + $0xe8] sm:$0xff]
    %v520 = vld [vmem:[#allocation2 + $0xf0] sm:$0xff]
    %v521 = vld [vmem:[#allocation2 + $0xf8] sm:$0xff]
    %v522 = vld [vmem:[%s2] sm:$0x1]
    %v524 = vlaneseq
    %v525 = vshrl.u32 %v524, 7
    %v526 = vsub.s32 0, %v525
    %v527 = vrot.slane %v522, %v526
    %v529 = vadd.f32 %v490, %v527
    %v530 = vadd.f32 %v491, %v527
    %v531 = vadd.f32 %v492, %v527
    %v532 = vadd.f32 %v493, %v527
    %v533 = vadd.f32 %v494, %v527
    %v534 = vadd.f32 %v495, %v527
    %v535 = vadd.f32 %v496, %v527
    %v536 = vadd.f32 %v497, %v527
    %v537 = vadd.f32 %v498, %v527
    %v538 = vadd.f32 %v499, %v527
    %v539 = vadd.f32 %v500, %v527
    %v540 = vadd.f32 %v501, %v527
    %v541 = vadd.f32 %v502, %v527
    %v542 = vadd.f32 %v503, %v527
    %v543 = vadd.f32 %v504, %v527
    %v544 = vadd.f32 %v505, %v527
    %v545 = vadd.f32 %v506, %v527
    %v546 = vadd.f32 %v507, %v527
    %v547 = vadd.f32 %v508, %v527
    %v548 = vadd.f32 %v509, %v527
    %v549 = vadd.f32 %v510, %v527
    %v550 = vadd.f32 %v511, %v527
    %v551 = vadd.f32 %v512, %v527
    %v552 = vadd.f32 %v513, %v527
    %v553 = vadd.f32 %v514, %v527
    %v554 = vadd.f32 %v515, %v527
    %v555 = vadd.f32 %v516, %v527
    %v556 = vadd.f32 %v517, %v527
    %v557 = vadd.f32 %v518, %v527
    %v558 = vadd.f32 %v519, %v527
    %v559 = vadd.f32 %v520, %v527
    %v560 = vadd.f32 %v521, %v527
    %v561 = vmax.f32 %v529, 0.0
    %v562 = vmax.f32 %v530, 0.0
    %v563 = vmax.f32 %v531, 0.0
    %v564 = vmax.f32 %v532, 0.0
    %v565 = vmax.f32 %v533, 0.0
    %v566 = vmax.f32 %v534, 0.0
    %v567 = vmax.f32 %v535, 0.0
    %v568 = vmax.f32 %v536, 0.0
    %v569 = vmax.f32 %v537, 0.0
    %v570 = vmax.f32 %v538, 0.0
    %v571 = vmax.f32 %v539, 0.0
    %v572 = vmax.f32 %v540, 0.0
    %v573 = vmax.f32 %v541, 0.0
    %v574 = vmax.f32 %v542, 0.0
    %v575 = vmax.f32 %v543, 0.0
    %v576 = vmax.f32 %v544, 0.0
    %v577 = vmax.f32 %v545, 0.0
    %v578 = vmax.f32 %v546, 0.0
    %v579 = vmax.f32 %v547, 0.0
    %v580 = vmax.f32 %v548, 0.0
    %v581 = vmax.f32 %v549, 0.0
    %v582 = vmax.f32 %v550, 0.0
    %v583 = vmax.f32 %v551, 0.0
    %v584 = vmax.f32 %v552, 0.0
    %v585 = vmax.f32 %v553, 0.0
    %v586 = vmax.f32 %v554, 0.0
    %v587 = vmax.f32 %v555, 0.0
    %v588 = vmax.f32 %v556, 0.0
    %v589 = vmax.f32 %v557, 0.0
    %v590 = vmax.f32 %v558, 0.0
    %v591 = vmax.f32 %v559, 0.0
    %v592 = vmax.f32 %v560, 0.0
    %v593 = vpack.c.bf16 %v562, %v561
    %v594 = vpack.c.bf16 %v564, %v563
    %v595 = vpack.c.bf16 %v566, %v565
    %v596 = vpack.c.bf16 %v568, %v567
    %v597 = vpack.c.bf16 %v570, %v569
    %v598 = vpack.c.bf16 %v572, %v571
    %v599 = vpack.c.bf16 %v574, %v573
    %v600 = vpack.c.bf16 %v576, %v575
    %v601 = vpack.c.bf16 %v578, %v577
    %v602 = vpack.c.bf16 %v580, %v579
    %v603 = vpack.c.bf16 %v582, %v581
    %v604 = vpack.c.bf16 %v584, %v583
    %v605 = vpack.c.bf16 %v586, %v585
    %v606 = vpack.c.bf16 %v588, %v587
    %v607 = vpack.c.bf16 %v590, %v589
    %v608 = vpack.c.bf16 %v592, %v591
    %v609 = vld [vmem:[%s3] sm:$0xf]
    %v610 = vld [vmem:[%s3 + $0x4] sm:$0xf]
    %v611 = vld [vmem:[%s3 + $0x8] sm:$0xf]
    %v612 = vld [vmem:[%s3 + $0xc] sm:$0xf]
    %v613 = vld [vmem:[%s3 + $0x10] sm:$0xf]
    %v614 = vld [vmem:[%s3 + $0x14] sm:$0xf]
    %v615 = vld [vmem:[%s3 + $0x18] sm:$0xf]
    %v616 = vld [vmem:[%s3 + $0x1c] sm:$0xf]
    %v617 = vld [vmem:[%s3 + $0x20] sm:$0xf]
    %v618 = vld [vmem:[%s3 + $0x24] sm:$0xf]
    %v619 = vld [vmem:[%s3 + $0x28] sm:$0xf]
    %v620 = vld [vmem:[%s3 + $0x2c] sm:$0xf]
    %v621 = vld [vmem:[%s3 + $0x30] sm:$0xf]
    %v622 = vld [vmem:[%s3 + $0x34] sm:$0xf]
    %v623 = vld [vmem:[%s3 + $0x38] sm:$0xf]
    %v624 = vld [vmem:[%s3 + $0x3c] sm:$0xf]
    %v641 = vunpack.c.l.b16 %v609
    %v642 = vunpack.c.l.b16 %v610
    %v643 = vunpack.c.l.b16 %v611
    %v644 = vunpack.c.l.b16 %v612
    %v645 = vunpack.c.l.b16 %v613
    %v646 = vunpack.c.l.b16 %v614
    %v647 = vunpack.c.l.b16 %v615
    %v648 = vunpack.c.l.b16 %v616
    %v649 = vunpack.c.l.b16 %v617
    %v650 = vunpack.c.l.b16 %v618
    %v651 = vunpack.c.l.b16 %v619
    %v652 = vunpack.c.l.b16 %v620
    %v653 = vunpack.c.l.b16 %v621
    %v654 = vunpack.c.l.b16 %v622
    %v655 = vunpack.c.l.b16 %v623
    %v656 = vunpack.c.l.b16 %v624
    %v657 = vpack.c.b16 %v642, %v641
    %v658 = vpack.c.b16 %v644, %v643
    %v659 = vpack.c.b16 %v646, %v645
    %v660 = vpack.c.b16 %v648, %v647
    %v661 = vpack.c.b16 %v650, %v649
    %v662 = vpack.c.b16 %v652, %v651
    %v663 = vpack.c.b16 %v654, %v653
    %v664 = vpack.c.b16 %v656, %v655
    %673 = vmatprep.subr.bf16.mxu0 0
    %674 = vmatpush1.bf16.msra.mxu0 %v664
    %675 = vmatprep.subr.bf16.mxu0 0
    %676 = vmatpush1.bf16.msra.mxu0 %v663
    %677 = vmatprep.subr.bf16.mxu0 0
    %678 = vmatpush1.bf16.msra.mxu0 %v662
    %679 = vmatprep.subr.bf16.mxu0 0
    %680 = vmatpush1.bf16.msra.mxu0 %v661
    %681 = vmatprep.subr.bf16.mxu0 0
    %682 = vmatpush1.bf16.msra.mxu0 %v660
    %683 = vmatprep.subr.bf16.mxu0 0
    %684 = vmatpush1.bf16.msra.mxu0 %v659
    %685 = vmatprep.subr.bf16.mxu0 0
    %686 = vmatpush1.bf16.msra.mxu0 %v658
    %687 = vmatprep.subr.bf16.mxu0 0
    %688 = vmatpush1.bf16.msra.mxu0 %v657
    %689 = vmatprep.subr.bf16.mxu0 0
    %690 = vmatpush2.bf16.msra.mxu0 0
    %691 = vmatprep.subr.bf16.mxu0 0
    %692 = vmatpush2.bf16.msra.mxu0 0
    %693 = vmatprep.subr.bf16.mxu0 0
    %694 = vmatpush2.bf16.msra.mxu0 0
    %695 = vmatprep.subr.bf16.mxu0 0
    %696 = vmatpush2.bf16.msra.mxu0 0
    %697 = vmatprep.subr.bf16.mxu0 0
    %698 = vmatpush2.bf16.msra.mxu0 0
    %699 = vmatprep.subr.bf16.mxu0 0
    %700 = vmatpush2.bf16.msra.mxu0 0
    %701 = vmatprep.subr.bf16.mxu0 0
    %702 = vmatpush2.bf16.msra.mxu0 0
    %703 = vmatprep.subr.bf16.mxu0 0
    %704 = vmatpush2.bf16.msra.mxu0 0
    %705 = vmatprep.mubr.bf16.mxu0 0
    %706 = vmatmul.mubr.bf16.gmra.mxu0 %v593
    %v707 = vpop.f32.mrf.mxu0
    %v708 = vadd.f32 0.0, %v707
    %v709 = vpop.f32.mrf.mxu0
    %v710 = vpop.f32.mrf.mxu0
    %v711 = vadd.f32 0.0, %v710
    %v712 = vpop.f32.mrf.mxu0
    %713 = vmatprep.mubr.bf16.mxu0 0
    %714 = vmatmul.mubr.bf16.gmra.mxu0 %v594
    %v715 = vpop.f32.mrf.mxu0
    %v716 = vadd.f32 0.0, %v715
    %v717 = vpop.f32.mrf.mxu0
    %v718 = vpop.f32.mrf.mxu0
    %v719 = vadd.f32 0.0, %v718
    %v720 = vpop.f32.mrf.mxu0
    %721 = vmatprep.mubr.bf16.mxu0 0
    %722 = vmatmul.mubr.bf16.gmra.mxu0 %v595
    %v723 = vpop.f32.mrf.mxu0
    %v724 = vadd.f32 0.0, %v723
    %v725 = vpop.f32.mrf.mxu0
    %v726 = vpop.f32.mrf.mxu0
    %v727 = vadd.f32 0.0, %v726
    %v728 = vpop.f32.mrf.mxu0
    %729 = vmatprep.mubr.bf16.mxu0 0
    %730 = vmatmul.mubr.bf16.gmra.mxu0 %v596
    %v731 = vpop.f32.mrf.mxu0
    %v732 = vadd.f32 0.0, %v731
    %v733 = vpop.f32.mrf.mxu0
    %v734 = vpop.f32.mrf.mxu0
    %v735 = vadd.f32 0.0, %v734
    %v736 = vpop.f32.mrf.mxu0
    %737 = vmatprep.mubr.bf16.mxu0 0
    %738 = vmatmul.mubr.bf16.gmra.mxu0 %v597
    %v739 = vpop.f32.mrf.mxu0
    %v740 = vadd.f32 0.0, %v739
    %v741 = vpop.f32.mrf.mxu0
    %v742 = vpop.f32.mrf.mxu0
    %v743 = vadd.f32 0.0, %v742
    %v744 = vpop.f32.mrf.mxu0
    %745 = vmatprep.mubr.bf16.mxu0 0
    %746 = vmatmul.mubr.bf16.gmra.mxu0 %v598
    %v747 = vpop.f32.mrf.mxu0
    %v748 = vadd.f32 0.0, %v747
    %v749 = vpop.f32.mrf.mxu0
    %v750 = vpop.f32.mrf.mxu0
    %v751 = vadd.f32 0.0, %v750
    %v752 = vpop.f32.mrf.mxu0
    %753 = vmatprep.mubr.bf16.mxu0 0
    %754 = vmatmul.mubr.bf16.gmra.mxu0 %v599
    %v755 = vpop.f32.mrf.mxu0
    %v756 = vadd.f32 0.0, %v755
    %v757 = vpop.f32.mrf.mxu0
    %v758 = vpop.f32.mrf.mxu0
    %v759 = vadd.f32 0.0, %v758
    %v760 = vpop.f32.mrf.mxu0
    %761 = vmatprep.mubr.bf16.mxu0 0
    %762 = vmatmul.mubr.bf16.gmra.mxu0 %v600
    %v763 = vpop.f32.mrf.mxu0
    %v764 = vadd.f32 0.0, %v763
    %v765 = vpop.f32.mrf.mxu0
    %v766 = vpop.f32.mrf.mxu0
    %v767 = vadd.f32 0.0, %v766
    %v768 = vpop.f32.mrf.mxu0
    %769 = vmatprep.mubr.bf16.mxu0 0
    %770 = vmatmul.mubr.bf16.gmra.mxu0 %v601
    %v771 = vpop.f32.mrf.mxu0
    %v772 = vadd.f32 0.0, %v771
    %v773 = vpop.f32.mrf.mxu0
    %v774 = vpop.f32.mrf.mxu0
    %v775 = vadd.f32 0.0, %v774
    %v776 = vpop.f32.mrf.mxu0
    %777 = vmatprep.mubr.bf16.mxu0 0
    %778 = vmatmul.mubr.bf16.gmra.mxu0 %v602
    %v779 = vpop.f32.mrf.mxu0
    %v780 = vadd.f32 0.0, %v779
    %v781 = vpop.f32.mrf.mxu0
    %v782 = vpop.f32.mrf.mxu0
    %v783 = vadd.f32 0.0, %v782
    %v784 = vpop.f32.mrf.mxu0
    %785 = vmatprep.mubr.bf16.mxu0 0
    %786 = vmatmul.mubr.bf16.gmra.mxu0 %v603
    %v787 = vpop.f32.mrf.mxu0
    %v788 = vadd.f32 0.0, %v787
    %v789 = vpop.f32.mrf.mxu0
    %v790 = vpop.f32.mrf.mxu0
    %v791 = vadd.f32 0.0, %v790
    %v792 = vpop.f32.mrf.mxu0
    %793 = vmatprep.mubr.bf16.mxu0 0
    %794 = vmatmul.mubr.bf16.gmra.mxu0 %v604
    %v795 = vpop.f32.mrf.mxu0
    %v796 = vadd.f32 0.0, %v795
    %v797 = vpop.f32.mrf.mxu0
    %v798 = vpop.f32.mrf.mxu0
    %v799 = vadd.f32 0.0, %v798
    %v800 = vpop.f32.mrf.mxu0
    %801 = vmatprep.mubr.bf16.mxu0 0
    %802 = vmatmul.mubr.bf16.gmra.mxu0 %v605
    %v803 = vpop.f32.mrf.mxu0
    %v804 = vadd.f32 0.0, %v803
    %v805 = vpop.f32.mrf.mxu0
    %v806 = vpop.f32.mrf.mxu0
    %v807 = vadd.f32 0.0, %v806
    %v808 = vpop.f32.mrf.mxu0
    %809 = vmatprep.mubr.bf16.mxu0 0
    %810 = vmatmul.mubr.bf16.gmra.mxu0 %v606
    %v811 = vpop.f32.mrf.mxu0
    %v812 = vadd.f32 0.0, %v811
    %v813 = vpop.f32.mrf.mxu0
    %v814 = vpop.f32.mrf.mxu0
    %v815 = vadd.f32 0.0, %v814
    %v816 = vpop.f32.mrf.mxu0
    %817 = vmatprep.mubr.bf16.mxu0 0
    %818 = vmatmul.mubr.bf16.gmra.mxu0 %v607
    %v819 = vpop.f32.mrf.mxu0
    %v820 = vadd.f32 0.0, %v819
    %v821 = vpop.f32.mrf.mxu0
    %v822 = vpop.f32.mrf.mxu0
    %v823 = vadd.f32 0.0, %v822
    %v824 = vpop.f32.mrf.mxu0
    %825 = vmatprep.mubr.bf16.mxu0 0
    %826 = vmatmul.mubr.bf16.gmra.mxu0 %v608
    %v827 = vpop.f32.mrf.mxu0
    %v828 = vadd.f32 0.0, %v827
    %v829 = vpop.f32.mrf.mxu0
    %v830 = vpop.f32.mrf.mxu0
    %v831 = vadd.f32 0.0, %v830
    %v832 = vpop.f32.mrf.mxu0
    %833 = vdwg.mxu0
    %v834 = vpack.c.bf16 %v711, %v708
    %v835 = vpack.c.bf16 %v719, %v716
    %v836 = vpack.c.bf16 %v727, %v724
    %v837 = vpack.c.bf16 %v735, %v732
    %v838 = vpack.c.bf16 %v743, %v740
    %v839 = vpack.c.bf16 %v751, %v748
    %v840 = vpack.c.bf16 %v759, %v756
    %v841 = vpack.c.bf16 %v767, %v764
    %v842 = vpack.c.bf16 %v775, %v772
    %v843 = vpack.c.bf16 %v783, %v780
    %v844 = vpack.c.bf16 %v791, %v788
    %v845 = vpack.c.bf16 %v799, %v796
    %v846 = vpack.c.bf16 %v807, %v804
    %v847 = vpack.c.bf16 %v815, %v812
    %v848 = vpack.c.bf16 %v823, %v820
    %v849 = vpack.c.bf16 %v831, %v828
    %v866 = vunpack.c.l.b16 %v834
    %v867 = vunpack.c.h.b16 %v834
    %v868 = vunpack.c.l.b16 %v835
    %v869 = vunpack.c.h.b16 %v835
    %v870 = vunpack.c.l.b16 %v836
    %v871 = vunpack.c.h.b16 %v836
    %v872 = vunpack.c.l.b16 %v837
    %v873 = vunpack.c.h.b16 %v837
    %v874 = vunpack.c.l.b16 %v838
    %v875 = vunpack.c.h.b16 %v838
    %v876 = vunpack.c.l.b16 %v839
    %v877 = vunpack.c.h.b16 %v839
    %v878 = vunpack.c.l.b16 %v840
    %v879 = vunpack.c.h.b16 %v840
    %v880 = vunpack.c.l.b16 %v841
    %v881 = vunpack.c.h.b16 %v841
    %v882 = vunpack.c.l.b16 %v842
    %v883 = vunpack.c.h.b16 %v842
    %v884 = vunpack.c.l.b16 %v843
    %v885 = vunpack.c.h.b16 %v843
    %v886 = vunpack.c.l.b16 %v844
    %v887 = vunpack.c.h.b16 %v844
    %v888 = vunpack.c.l.b16 %v845
    %v889 = vunpack.c.h.b16 %v845
    %v890 = vunpack.c.l.b16 %v846
    %v891 = vunpack.c.h.b16 %v846
    %v892 = vunpack.c.l.b16 %v847
    %v893 = vunpack.c.h.b16 %v847
    %v894 = vunpack.c.l.b16 %v848
    %v895 = vunpack.c.h.b16 %v848
    %v896 = vunpack.c.l.b16 %v849
    %v897 = vunpack.c.h.b16 %v849
    %v898 = vpack.c.b16 %v866, %v866
    %v899 = vpack.c.b16 %v867, %v867
    %v900 = vpack.c.b16 %v868, %v868
    %v901 = vpack.c.b16 %v869, %v869
    %v902 = vpack.c.b16 %v870, %v870
    %v903 = vpack.c.b16 %v871, %v871
    %v904 = vpack.c.b16 %v872, %v872
    %v905 = vpack.c.b16 %v873, %v873
    %v906 = vpack.c.b16 %v874, %v874
    %v907 = vpack.c.b16 %v875, %v875
    %v908 = vpack.c.b16 %v876, %v876
    %v909 = vpack.c.b16 %v877, %v877
    %v910 = vpack.c.b16 %v878, %v878
    %v911 = vpack.c.b16 %v879, %v879
    %v912 = vpack.c.b16 %v880, %v880
    %v913 = vpack.c.b16 %v881, %v881
    %v914 = vpack.c.b16 %v882, %v882
    %v915 = vpack.c.b16 %v883, %v883
    %v916 = vpack.c.b16 %v884, %v884
    %v917 = vpack.c.b16 %v885, %v885
    %v918 = vpack.c.b16 %v886, %v886
    %v919 = vpack.c.b16 %v887, %v887
    %v920 = vpack.c.b16 %v888, %v888
    %v921 = vpack.c.b16 %v889, %v889
    %v922 = vpack.c.b16 %v890, %v890
    %v923 = vpack.c.b16 %v891, %v891
    %v924 = vpack.c.b16 %v892, %v892
    %v925 = vpack.c.b16 %v893, %v893
    %v926 = vpack.c.b16 %v894, %v894
    %v927 = vpack.c.b16 %v895, %v895
    %v928 = vpack.c.b16 %v896, %v896
    %v929 = vpack.c.b16 %v897, %v897
    %962 = vst [vmem:[%s4] sm:$0xf] %v898
    %963 = vst [vmem:[%s4 + $0x4] sm:$0xf] %v899
    %964 = vst [vmem:[%s4 + $0x8] sm:$0xf] %v900
    %965 = vst [vmem:[%s4 + $0xc] sm:$0xf] %v901
    %966 = vst [vmem:[%s4 + $0x10] sm:$0xf] %v902
    %967 = vst [vmem:[%s4 + $0x14] sm:$0xf] %v903
    %968 = vst [vmem:[%s4 + $0x18] sm:$0xf] %v904
    %969 = vst [vmem:[%s4 + $0x1c] sm:$0xf] %v905
    %970 = vst [vmem:[%s4 + $0x20] sm:$0xf] %v906
    %971 = vst [vmem:[%s4 + $0x24] sm:$0xf] %v907
    %972 = vst [vmem:[%s4 + $0x28] sm:$0xf] %v908
    %973 = vst [vmem:[%s4 + $0x2c] sm:$0xf] %v909
    %974 = vst [vmem:[%s4 + $0x30] sm:$0xf] %v910
    %975 = vst [vmem:[%s4 + $0x34] sm:$0xf] %v911
    %976 = vst [vmem:[%s4 + $0x38] sm:$0xf] %v912
    %977 = vst [vmem:[%s4 + $0x3c] sm:$0xf] %v913
    %978 = vst [vmem:[%s4 + $0x40] sm:$0xf] %v914
    %979 = vst [vmem:[%s4 + $0x44] sm:$0xf] %v915
    %980 = vst [vmem:[%s4 + $0x48] sm:$0xf] %v916
    %981 = vst [vmem:[%s4 + $0x4c] sm:$0xf] %v917
    %982 = vst [vmem:[%s4 + $0x50] sm:$0xf] %v918
    %983 = vst [vmem:[%s4 + $0x54] sm:$0xf] %v919
    %984 = vst [vmem:[%s4 + $0x58] sm:$0xf] %v920
    %985 = vst [vmem:[%s4 + $0x5c] sm:$0xf] %v921
    %986 = vst [vmem:[%s4 + $0x60] sm:$0xf] %v922
    %987 = vst [vmem:[%s4 + $0x64] sm:$0xf] %v923
    %988 = vst [vmem:[%s4 + $0x68] sm:$0xf] %v924
    %989 = vst [vmem:[%s4 + $0x6c] sm:$0xf] %v925
    %990 = vst [vmem:[%s4 + $0x70] sm:$0xf] %v926
    %991 = vst [vmem:[%s4 + $0x74] sm:$0xf] %v927
    %992 = vst [vmem:[%s4 + $0x78] sm:$0xf] %v928
    %993 = vst [vmem:[%s4 + $0x7c] sm:$0xf] %v929
  $region25: #{gcn_forward.2} parent=0 // pred_fallthru
    _
  // Predicated region
  $region26: #{gcn_forward.2} parent=0 // pred_check
    _
  $region27: #{gcn_forward.2} parent=0 // pred_check_branch
    %995 = sbr.rel (0) target = $region29
  $region28: #{gcn_forward.2} parent=0 // pred_region
    _
  $region29: #{gcn_forward.2} parent=0 // pred_fallthru
    _
  // Predicated region
  $region30: #{gcn_forward.2} parent=0 // pred_check
    _
  $region31: #{gcn_forward.2} parent=0 // pred_check_branch
    %997 = sbr.rel (0) target = $region33
  $region32: #{gcn_forward.2} parent=0 // pred_region
    _
  $region33: #{gcn_forward.2} parent=0 // pred_fallthru
    _

</llo_original>
